<compile_context>
chip_gen: v7x
topology: tpu7x:2x2x1
jax: 0.10.0
libtpu: 0.0.40
codegen_flags: <defaults>
</compile_context>

<pallas_src>
import functools

import jax
import jax.numpy as jnp
from jax.experimental import pallas as pl
from jax.experimental.pallas import tpu as pltpu

BN_EPS = 1e-5
# RReLU in eval mode == LeakyReLU with slope (lower + upper) / 2, lower=1/8, upper=1/3
RRELU_SLOPE = (1.0 / 8.0 + 1.0 / 3.0) / 2.0
LANE = 128  # TPU lane width; output class dim is padded to this


# --------------------------------------------------------------------------- #
# Kernel
# --------------------------------------------------------------------------- #
def fusion_head_kernel(x1_ref, x2_ref, w1a_ref, w1b_ref, w1s_ref, b1_ref,
                       wse_ref, wses_ref, bse_ref, w2_ref, b2_ref,
                       o_ref, acc_ref, h_ref, *, n_k, tile_h):
    """Grid = (batch_blocks, 2*n_k).  Axis 1 streams the hidden dim twice:
    steps [0, n_k)      : fc1 column-slabs  (h columns finished per step)
    steps [n_k, 2*n_k)  : SE (wse) row-slabs, accumulated; epilogue at last.
    """
    s = pl.program_id(1)

    # SE-matmul accumulator: zero once per batch block.
    @pl.when(s == 0)
    def _():
        acc_ref[...] = jnp.zeros_like(acc_ref)

    # ---- Phase 1: fc1 (BN folded) by output-column slabs + RReLU ----------
    @pl.when(s < n_k)
    def _():
        h_col = (jnp.dot(x1_ref[...], w1a_ref[...].astype(jnp.bfloat16),
                         preferred_element_type=jnp.float32)
                 + jnp.dot(x2_ref[...], w1b_ref[...].astype(jnp.bfloat16),
                           preferred_element_type=jnp.float32))
        # int8 dequant (per-column scale) + BN-folded bias, then RReLU (eval).
        h_col = h_col * w1s_ref[...] + b1_ref[...]
        h_col = jnp.where(h_col >= 0.0, h_col, h_col * RRELU_SLOPE)
        h_ref[s] = h_col                      # dynamic index on leading dim

    # ---- Phase 2: SE linear, streamed over K (rows of wse) -----------------
    @pl.when(s >= n_k)
    def _():
        k = s - n_k
        acc_ref[...] += jnp.dot(h_ref[k].astype(jnp.bfloat16),
                                wse_ref[...].astype(jnp.bfloat16),
                                preferred_element_type=jnp.float32)

    # ---- Epilogue: sigmoid gate, DropPath residual (identity), fc2 ---------
    @pl.when(s == 2 * n_k - 1)
    def _():
        y = acc_ref[...] * wses_ref[...] + bse_ref[...]
        gate = 1.0 + jax.nn.sigmoid(y)        # z = h*sigmoid(y) + h
        out = jnp.zeros(o_ref.shape, jnp.float32)
        for k in range(n_k):                  # static unroll (n_k is small)
            z_k = (h_ref[k] * gate[:, k * tile_h:(k + 1) * tile_h]
                   ).astype(jnp.bfloat16)
            out += jnp.dot(z_k, w2_ref[k * tile_h:(k + 1) * tile_h, :],
                           preferred_element_type=jnp.float32)
        o_ref[...] = (out + b2_ref[...]).astype(o_ref.dtype)


# --------------------------------------------------------------------------- #
# Host-side parameter prep
# --------------------------------------------------------------------------- #
def _quantize_cols(w, qdtype):
    """Per-output-column symmetric quantization: w ~= q.astype(f32) * scale."""
    absmax = jnp.maximum(jnp.max(jnp.abs(w), axis=0, keepdims=True), 1e-12)
    if jnp.issubdtype(qdtype, jnp.integer):
        scale = absmax / 127.0
        q = jnp.clip(jnp.round(w / scale), -127.0, 127.0).astype(qdtype)
    else:  # e.g. jnp.float8_e4m3fn (headroom below e4m3 max of 448)
        scale = absmax / 240.0
        q = (w / scale).astype(qdtype)
    return q, scale.astype(jnp.float32)


def prepare_params(w1, b1, wse, bse, w2, b2,
                   bn_gamma=1.0, bn_beta=0.0, bn_mean=0.0, bn_var=1.0,
                   qdtype=jnp.int8):
    """One-time host-side prep.

    Linear params are (in, out)-layout (PyTorch weight transposed).  Folds the
    scalar eval-mode BatchNorm1d(1) into fc1, quantizes the two HxH matrices
    to `qdtype` with per-column f32 scales (weights are upcast to bf16 inside
    the kernel, so int8 keeps the DMA win on every chip; pass
    jnp.float8_e4m3fn to store fp8 instead, e.g. for v7x), and zero-pads fc2
    to a 128-lane-dense output.
    """
    H = w1.shape[0]
    F = H // 2
    C = w2.shape[1]

    # BatchNorm1d(1), eval mode: bn(h) = scale*h + shift with scalar params.
    scale = bn_gamma / jnp.sqrt(bn_var + BN_EPS)
    shift = bn_beta - bn_mean * scale
    w1f = (w1 * scale).astype(jnp.float32)
    b1f = (b1 * scale + shift).astype(jnp.float32)

    w1_q, w1_s = _quantize_cols(w1f, qdtype)          # per-output-column scale
    wse_q, wse_s = _quantize_cols(wse.astype(jnp.float32), qdtype)

    # Pad class dim to LANE for an unmasked, lane-dense store.
    Cp = max(LANE, ((C + LANE - 1) // LANE) * LANE)
    w2p = jnp.zeros((H, Cp), jnp.float32).at[:, :C].set(w2).astype(jnp.bfloat16)
    b2p = jnp.zeros((1, Cp), jnp.float32).at[:, :C].set(b2)

    return dict(w1a_q=w1_q[:F], w1b_q=w1_q[F:], w1_s=w1_s, b1=b1f,
                wse_q=wse_q, wse_s=wse_s, bse=bse.astype(jnp.float32),
                w2=w2p, b2=b2p, C=C, H=H, F=F)


def _pick_tile(H):
    """Largest hidden-dim slab in {512, 256, 128} dividing H with >= 2 slabs."""
    for t in (512, 256, 128):
        if H % t == 0 and H // t >= 2:
            return t
    return H


# --------------------------------------------------------------------------- #
# Wrapper
# --------------------------------------------------------------------------- #
def fusion_head(x1, x2, params, *, block_b=None, tile_h=None):
    """x1, x2: (B, F) pooled backbone features (f32). params from prepare_params."""
    p = params
    B, F = x1.shape
    H, C = p["H"], p["C"]
    Cp = p["w2"].shape[1]
    assert F == p["F"]

    if block_b is None:
        # Cap at 128 rows so realistic serving batches give >=2 batch blocks
        # and the "parallel" axis shards across both v7x TensorCores.
        block_b = B if B <= 128 else 128
    if tile_h is None:
        tile_h = _pick_tile(H)
    assert H % tile_h == 0 and (tile_h % LANE == 0 or tile_h == H)
    n_k = H // tile_h
    last = n_k - 1

    x1b = x1.astype(jnp.bfloat16)
    x2b = x2.astype(jnp.bfloat16)

    grid = (pl.cdiv(B, block_b), 2 * n_k)

    # Index maps.  During the "other" phase each streamed operand holds its
    # previous block index, so no redundant DMA is issued.
    def batch_map(b, s):
        return (b, 0)

    def w1_col_map(b, s):            # fc1 column-slabs (clamped in phase 2)
        return (0, jnp.minimum(s, last))

    def wse_row_map(b, s):           # SE row-slabs (held at 0 in phase 1)
        return (jnp.maximum(s - n_k, 0), 0)

    def const_map(b, s):
        return (0, 0)

    kernel = functools.partial(fusion_head_kernel, n_k=n_k, tile_h=tile_h)

    # Scoped-VMEM limit sized from the real footprint (double-buffered inputs
    # + f32 scratch), floored at 32 MiB, capped at 96 MiB.
    qb = p["w1a_q"].dtype.itemsize
    one_copy = (2 * block_b * F * 2            # x1, x2 (bf16)
                + 2 * F * tile_h * qb          # w1a, w1b slabs
                + 2 * tile_h * 4               # w1 scale + folded-bias slabs
                + tile_h * H * qb              # wse slab
                + 2 * H * 4                    # wse scale + bse
                + H * Cp * 2 + Cp * 4          # w2 (bf16) + b2
                + block_b * Cp * 4)            # output block
    scratch_bytes = 2 * block_b * H * 4        # acc + h slabs (f32)
    vmem_limit = int(min(96 * 2**20,
                         max(32 * 2**20, 2 * one_copy + scratch_bytes + (8 << 20))))

    out = pl.pallas_call(
        kernel,
        out_shape=jax.ShapeDtypeStruct((B, Cp), jnp.float32),
        grid_spec=pltpu.PrefetchScalarGridSpec(
            num_scalar_prefetch=0,
            grid=grid,
            in_specs=[
                pl.BlockSpec((block_b, F), batch_map),        # x1
                pl.BlockSpec((block_b, F), batch_map),        # x2
                pl.BlockSpec((F, tile_h), w1_col_map),        # w1a (quantized)
                pl.BlockSpec((F, tile_h), w1_col_map),        # w1b (quantized)
                pl.BlockSpec((1, tile_h), w1_col_map),        # w1 dequant scale
                pl.BlockSpec((1, tile_h), w1_col_map),        # b1 (BN folded)
                pl.BlockSpec((tile_h, H), wse_row_map),       # wse (quantized)
                pl.BlockSpec((1, H), const_map),              # wse dequant scale
                pl.BlockSpec((1, H), const_map),              # bse
                pl.BlockSpec((H, Cp), const_map),             # w2 (padded, bf16)
                pl.BlockSpec((1, Cp), const_map),             # b2 (padded)
            ],
            out_specs=pl.BlockSpec((block_b, Cp), batch_map),
            scratch_shapes=[
                pltpu.VMEM((block_b, H), jnp.float32),            # SE accumulator
                pltpu.VMEM((n_k, block_b, tile_h), jnp.float32),  # post-RReLU h
            ],
        ),
        compiler_params=pltpu.CompilerParams(
            dimension_semantics=("parallel", "arbitrary"),
            vmem_limit_bytes=vmem_limit),
    )(x1b, x2b, p["w1a_q"], p["w1b_q"], p["w1_s"], p["b1"],
      p["wse_q"], p["wse_s"], p["bse"], p["w2"], p["b2"])

    return out[:, :C]


# --------------------------------------------------------------------------- #
# Pure-JAX references
# --------------------------------------------------------------------------- #
def reference_head(x, w1, b1, wse, bse, w2, b2,
                   bn_gamma=1.0, bn_beta=0.0, bn_mean=0.0, bn_var=1.0):
    """Exact f32 reference following the PyTorch module's eval-mode forward."""
    h = x @ w1 + b1
    scale = bn_gamma / jnp.sqrt(bn_var + BN_EPS)
    h = scale * h + (bn_beta - bn_mean * scale)
    h = jnp.where(h >= 0.0, h, h * RRELU_SLOPE)
    y = jax.nn.sigmoid(h @ wse + bse)
    z = h * y + h
    return z @ w2 + b2


def reference_from_params(x1, x2, params):
    """f32 reference using the kernel's quantized weights (isolates kernel error)."""
    p = params
    h = (x1 @ p["w1a_q"].astype(jnp.float32)
         + x2 @ p["w1b_q"].astype(jnp.float32)) * p["w1_s"] + p["b1"]
    h = jnp.where(h >= 0.0, h, h * RRELU_SLOPE)
    y = jax.nn.sigmoid((h @ p["wse_q"].astype(jnp.float32)) * p["wse_s"] + p["bse"])
    z = h * (1.0 + y)
    out = z @ p["w2"].astype(jnp.float32) + p["b2"]
    return out[:, :p["C"]]


# --------------------------------------------------------------------------- #
# Demo / correctness check
# --------------------------------------------------------------------------- #
if __name__ == "__main__":
    # Small shapes consistent with the module structure:
    #   each backbone emits (B, F, 1, 1) pooled features, hidden = 2*F, classes = 10.
    B, F, C = 8, 128, 10
    H = 2 * F  # self.hidden analogue (4096 in the real model)

    key = jax.random.PRNGKey(0)
    k_x1, k_x2, k_w1, k_b1, k_wse, k_bse, k_w2, k_b2 = jax.random.split(key, 8)

    # Stand-ins for `_, x1 = self.model1(image1)` / `_, x2 = self.model2(image2)`
    x1 = jax.random.normal(k_x1, (B, F, 1, 1), dtype=jnp.float32)
    x2 = jax.random.normal(k_x2, (B, F, 1, 1), dtype=jnp.float32)
    x1f = x1[:, :, 0, 0]
    x2f = x2[:, :, 0, 0]
    # torch.cat((x1, x2), dim=1).squeeze(-1).squeeze(-1) -> (B, H) (reference only)
    fusionfea = jnp.concatenate([x1f, x2f], axis=1)

    # Parameters (deterministic). PyTorch Linear computes x @ W.T + b; we store W.T.
    kaiming_std = (2.0 / H) ** 0.5
    w1 = jax.random.normal(k_w1, (H, H), dtype=jnp.float32) * kaiming_std
    b1 = jax.random.uniform(k_b1, (1, H), dtype=jnp.float32,
                            minval=-(1.0 / H) ** 0.5, maxval=(1.0 / H) ** 0.5)
    wse = jax.random.normal(k_wse, (H, H), dtype=jnp.float32) * kaiming_std
    bse = jax.random.uniform(k_bse, (1, H), dtype=jnp.float32,
                             minval=-(1.0 / H) ** 0.5, maxval=(1.0 / H) ** 0.5)
    bound = (1.0 / H) ** 0.5
    w2 = jax.random.uniform(k_w2, (H, C), dtype=jnp.float32, minval=-bound, maxval=bound)
    b2 = jax.random.uniform(k_b2, (1, C), dtype=jnp.float32, minval=-bound, maxval=bound)

    # Untrained BatchNorm1d(1) running stats / affine (a trained checkpoint's
    # scalars slot in here and get folded the same way).
    bn_gamma, bn_beta, bn_mean, bn_var = 1.0, 0.0, 0.0, 1.0

    params = prepare_params(w1, b1, wse, bse, w2, b2,
                            bn_gamma, bn_beta, bn_mean, bn_var)

    out = fusion_head(x1f, x2f, params)
    out = jax.block_until_ready(out)
    assert out.shape == (B, C)

    # Strict check: kernel vs f32 math with the same (quantized) weights
    # -> only bf16 matmul rounding differs.
    ref_q = reference_from_params(x1f, x2f, params)
    assert jnp.allclose(out, ref_q, atol=5e-2, rtol=5e-2), \
        "mismatch vs quantized-weight pure-JAX reference"

    # Sanity check vs the exact f32 module math (bounds int8 + bf16 error).
    ref = reference_head(fusionfea, w1, b1, wse, bse, w2, b2,
                         bn_gamma, bn_beta, bn_mean, bn_var)
    assert jnp.allclose(out, ref, atol=2e-1, rtol=2e-1), \
        "mismatch vs exact f32 pure-JAX reference"

    print("KERNEL_OK")
</pallas_src>

<mosaic_0001>
module attributes {stable_mosaic.version = 11 : i64} {
  func.func @fusion_head_kernel(%arg0: i32, %arg1: i32, %arg2: memref<8x128xbf16, #tpu.memory_space<vmem>>, %arg3: memref<8x128xbf16, #tpu.memory_space<vmem>>, %arg4: memref<128x128xi8, #tpu.memory_space<vmem>>, %arg5: memref<128x128xi8, #tpu.memory_space<vmem>>, %arg6: memref<1x128xf32, #tpu.memory_space<vmem>>, %arg7: memref<1x128xf32, #tpu.memory_space<vmem>>, %arg8: memref<128x256xi8, #tpu.memory_space<vmem>>, %arg9: memref<1x256xf32, #tpu.memory_space<vmem>>, %arg10: memref<1x256xf32, #tpu.memory_space<vmem>>, %arg11: memref<256x128xbf16, #tpu.memory_space<vmem>>, %arg12: memref<1x128xf32, #tpu.memory_space<vmem>>, %arg13: memref<8x128xf32, #tpu.memory_space<vmem>>, %arg14: memref<8x256xf32, #tpu.memory_space<vmem>>, %arg15: memref<2x8x128xf32, #tpu.memory_space<vmem>>) attributes {dimension_semantics = [#tpu.dimension_semantics<parallel>, #tpu.dimension_semantics<arbitrary>], iteration_bounds = array<i64: 1, 4>, scalar_prefetch = 0 : i64, scratch_operands = 2 : i64, tpu.core_type = #tpu.core_type<tc>, window_params = [{transform_indices = @transform_0, window_bounds = array<i64: 8, 128>}, {transform_indices = @transform_1, window_bounds = array<i64: 8, 128>}, {transform_indices = @transform_2, window_bounds = array<i64: 128, 128>}, {transform_indices = @transform_3, window_bounds = array<i64: 128, 128>}, {transform_indices = @transform_4, window_bounds = array<i64: 1, 128>}, {transform_indices = @transform_5, window_bounds = array<i64: 1, 128>}, {transform_indices = @transform_6, window_bounds = array<i64: 128, 256>}, {pipeline_mode = #tpu.pipeline_mode<synchronous>, transform_indices = @transform_7, window_bounds = array<i64: 1, 256>}, {pipeline_mode = #tpu.pipeline_mode<synchronous>, transform_indices = @transform_8, window_bounds = array<i64: 1, 256>}, {pipeline_mode = #tpu.pipeline_mode<synchronous>, transform_indices = @transform_9, window_bounds = array<i64: 256, 128>}, {pipeline_mode = #tpu.pipeline_mode<synchronous>, transform_indices = @transform_10, window_bounds = array<i64: 1, 128>}, {transform_indices = @transform_11, window_bounds = array<i64: 8, 128>}]} {
    %c0_i32 = arith.constant 0 : i32
    %0 = arith.cmpi eq, %arg1, %c0_i32 : i32
    %1 = arith.extui %0 : i1 to i32
    %c0_i32_0 = arith.constant 0 : i32
    %2 = arith.cmpi ne, %1, %c0_i32_0 : i32
    scf.if %2 {
      %cst = arith.constant 0.000000e+00 : f32
      %12 = vector.broadcast %cst : f32 to vector<8x256xf32>
      %c0 = arith.constant 0 : index
      %c0_5 = arith.constant 0 : index
      %13 = vector.load %arg14[%c0, %c0_5] : memref<8x256xf32, #tpu.memory_space<vmem>>, vector<8x256xf32>
      tpu.vector_store %arg14[%c0, %c0_5], %12 {strides = array<i32>} : memref<8x256xf32, #tpu.memory_space<vmem>>, vector<8x256xf32>,
    } else {
    }
    %c2_i32 = arith.constant 2 : i32
    %3 = arith.cmpi slt, %arg1, %c2_i32 : i32
    %4 = arith.extui %3 : i1 to i32
    %c0_i32_1 = arith.constant 0 : i32
    %5 = arith.cmpi ne, %4, %c0_i32_1 : i32
    scf.if %5 {
      %c0 = arith.constant 0 : index
      %c0_5 = arith.constant 0 : index
      %12 = vector.load %arg2[%c0, %c0_5] : memref<8x128xbf16, #tpu.memory_space<vmem>>, vector<8x128xbf16>
      %c0_6 = arith.constant 0 : index
      %c0_7 = arith.constant 0 : index
      %13 = vector.load %arg4[%c0_6, %c0_7] : memref<128x128xi8, #tpu.memory_space<vmem>>, vector<128x128xi8>
      %14 = arith.sitofp %13 : vector<128x128xi8> to vector<128x128xbf16>
      %cst = arith.constant dense<0.000000e+00> : vector<8x128xf32>
      %15 = tpu.matmul %12, %14, %cst {dimension_numbers = #tpu.dot_dimension_numbers<[1], [0], [0], [1], [0, 0, 1, 1], [], []>} : vector<8x128xbf16>, vector<128x128xbf16>, vector<8x128xf32> -> vector<8x128xf32>
      %c0_8 = arith.constant 0 : index
      %c0_9 = arith.constant 0 : index
      %16 = vector.load %arg3[%c0_8, %c0_9] : memref<8x128xbf16, #tpu.memory_space<vmem>>, vector<8x128xbf16>
      %c0_10 = arith.constant 0 : index
      %c0_11 = arith.constant 0 : index
      %17 = vector.load %arg5[%c0_10, %c0_11] : memref<128x128xi8, #tpu.memory_space<vmem>>, vector<128x128xi8>
      %18 = arith.sitofp %17 : vector<128x128xi8> to vector<128x128xbf16>
      %cst_12 = arith.constant dense<0.000000e+00> : vector<8x128xf32>
      %19 = tpu.matmul %16, %18, %cst_12 {dimension_numbers = #tpu.dot_dimension_numbers<[1], [0], [0], [1], [0, 0, 1, 1], [], []>} : vector<8x128xbf16>, vector<128x128xbf16>, vector<8x128xf32> -> vector<8x128xf32>
      %20 = arith.addf %15, %19 : vector<8x128xf32>
      %c0_13 = arith.constant 0 : index
      %c0_14 = arith.constant 0 : index
      %21 = vector.load %arg6[%c0_13, %c0_14] : memref<1x128xf32, #tpu.memory_space<vmem>>, vector<1x128xf32>
      %22 = vector.broadcast %21 : vector<1x128xf32> to vector<8x128xf32>
      %23 = arith.mulf %20, %22 : vector<8x128xf32>
      %c0_15 = arith.constant 0 : index
      %c0_16 = arith.constant 0 : index
      %24 = vector.load %arg7[%c0_15, %c0_16] : memref<1x128xf32, #tpu.memory_space<vmem>>, vector<1x128xf32>
      %25 = vector.broadcast %24 : vector<1x128xf32> to vector<8x128xf32>
      %26 = arith.addf %23, %25 : vector<8x128xf32>
      %cst_17 = arith.constant 0.000000e+00 : f32
      %27 = vector.broadcast %cst_17 : f32 to vector<8x128xf32>
      %28 = arith.cmpf oge, %26, %27 : vector<8x128xf32>
      %cst_18 = arith.constant 0.229166672 : f32
      %29 = vector.broadcast %cst_18 : f32 to vector<8x128xf32>
      %30 = arith.mulf %26, %29 : vector<8x128xf32>
      %31 = arith.select %28, %26, %30 : vector<8x128xi1>, vector<8x128xf32>
      %32 = arith.index_cast %arg1 : i32 to index
      %c0_19 = arith.constant 0 : index
      %c0_20 = arith.constant 0 : index
      %33 = vector.load %arg15[%32, %c0_19, %c0_20] : memref<2x8x128xf32, #tpu.memory_space<vmem>>, vector<1x8x128xf32>
      %34 = vector.shape_cast %33 : vector<1x8x128xf32> to vector<8x128xf32>
      %35 = vector.shape_cast %31 : vector<8x128xf32> to vector<1x8x128xf32>
      tpu.vector_store %arg15[%32, %c0_19, %c0_20], %35 {strides = array<i32>} : memref<2x8x128xf32, #tpu.memory_space<vmem>>, vector<1x8x128xf32>,
    } else {
    }
    %c2_i32_2 = arith.constant 2 : i32
    %6 = arith.cmpi sge, %arg1, %c2_i32_2 : i32
    %7 = arith.extui %6 : i1 to i32
    %c0_i32_3 = arith.constant 0 : i32
    %8 = arith.cmpi ne, %7, %c0_i32_3 : i32
    scf.if %8 {
      %c2_i32_5 = arith.constant 2 : i32
      %12 = arith.subi %arg1, %c2_i32_5 : i32
      %c0 = arith.constant 0 : index
      %c0_6 = arith.constant 0 : index
      %13 = vector.load %arg14[%c0, %c0_6] : memref<8x256xf32, #tpu.memory_space<vmem>>, vector<8x256xf32>
      %14 = arith.index_cast %12 : i32 to index
      %c0_7 = arith.constant 0 : index
      %c0_8 = arith.constant 0 : index
      %15 = vector.load %arg15[%14, %c0_7, %c0_8] : memref<2x8x128xf32, #tpu.memory_space<vmem>>, vector<1x8x128xf32>
      %16 = vector.shape_cast %15 : vector<1x8x128xf32> to vector<8x128xf32>
      %17 = arith.truncf %16 : vector<8x128xf32> to vector<8x128xbf16>
      %c0_9 = arith.constant 0 : index
      %c0_10 = arith.constant 0 : index
      %18 = vector.load %arg8[%c0_9, %c0_10] : memref<128x256xi8, #tpu.memory_space<vmem>>, vector<128x256xi8>
      %19 = arith.sitofp %18 : vector<128x256xi8> to vector<128x256xbf16>
      %cst = arith.constant dense<0.000000e+00> : vector<8x256xf32>
      %20 = tpu.matmul %17, %19, %cst {dimension_numbers = #tpu.dot_dimension_numbers<[1], [0], [0], [1], [0, 0, 1, 1], [], []>} : vector<8x128xbf16>, vector<128x256xbf16>, vector<8x256xf32> -> vector<8x256xf32>
      %21 = arith.addf %13, %20 : vector<8x256xf32>
      %c0_11 = arith.constant 0 : index
      %c0_12 = arith.constant 0 : index
      %22 = vector.load %arg14[%c0_11, %c0_12] : memref<8x256xf32, #tpu.memory_space<vmem>>, vector<8x256xf32>
      tpu.vector_store %arg14[%c0_11, %c0_12], %21 {strides = array<i32>} : memref<8x256xf32, #tpu.memory_space<vmem>>, vector<8x256xf32>,
    } else {
    }
    %c3_i32 = arith.constant 3 : i32
    %9 = arith.cmpi eq, %arg1, %c3_i32 : i32
    %10 = arith.extui %9 : i1 to i32
    %c0_i32_4 = arith.constant 0 : i32
    %11 = arith.cmpi ne, %10, %c0_i32_4 : i32
    scf.if %11 {
      %c0 = arith.constant 0 : index
      %c0_5 = arith.constant 0 : index
      %12 = vector.load %arg14[%c0, %c0_5] : memref<8x256xf32, #tpu.memory_space<vmem>>, vector<8x256xf32>
      %c0_6 = arith.constant 0 : index
      %c0_7 = arith.constant 0 : index
      %13 = vector.load %arg9[%c0_6, %c0_7] : memref<1x256xf32, #tpu.memory_space<vmem>>, vector<1x256xf32>
      %14 = vector.broadcast %13 : vector<1x256xf32> to vector<8x256xf32>
      %15 = arith.mulf %12, %14 : vector<8x256xf32>
      %c0_8 = arith.constant 0 : index
      %c0_9 = arith.constant 0 : index
      %16 = vector.load %arg10[%c0_8, %c0_9] : memref<1x256xf32, #tpu.memory_space<vmem>>, vector<1x256xf32>
      %17 = vector.broadcast %16 : vector<1x256xf32> to vector<8x256xf32>
      %18 = arith.addf %15, %17 : vector<8x256xf32>
      %19 = arith.negf %18 : vector<8x256xf32>
      %20 = math.exp %19 : vector<8x256xf32>
      %cst = arith.constant 1.000000e+00 : f32
      %21 = vector.broadcast %cst : f32 to vector<8x256xf32>
      %22 = arith.addf %21, %20 : vector<8x256xf32>
      %23 = arith.divf %21, %22 : vector<8x256xf32>
      %cst_10 = arith.constant 1.000000e+00 : f32
      %24 = vector.broadcast %cst_10 : f32 to vector<8x256xf32>
      %25 = arith.addf %24, %23 : vector<8x256xf32>
      %cst_11 = arith.constant 0.000000e+00 : f32
      %26 = vector.broadcast %cst_11 : f32 to vector<8x128xf32>
      %c0_12 = arith.constant 0 : index
      %c0_13 = arith.constant 0 : index
      %c0_14 = arith.constant 0 : index
      %27 = vector.load %arg15[%c0_12, %c0_13, %c0_14] : memref<2x8x128xf32, #tpu.memory_space<vmem>>, vector<1x8x128xf32>
      %28 = vector.shape_cast %27 : vector<1x8x128xf32> to vector<8x128xf32>
      %29 = vector.extract_strided_slice %25 {offsets = [0, 0], sizes = [8, 128], strides = [1, 1]} : vector<8x256xf32> to vector<8x128xf32>
      %30 = arith.mulf %28, %29 : vector<8x128xf32>
      %31 = arith.truncf %30 : vector<8x128xf32> to vector<8x128xbf16>
      %c0_15 = arith.constant 0 : index
      %c0_16 = arith.constant 0 : index
      %32 = vector.load %arg11[%c0_15, %c0_16] : memref<256x128xbf16, #tpu.memory_space<vmem>>, vector<128x128xbf16>
      %cst_17 = arith.constant dense<0.000000e+00> : vector<8x128xf32>
      %33 = tpu.matmul %31, %32, %cst_17 {dimension_numbers = #tpu.dot_dimension_numbers<[1], [0], [0], [1], [0, 0, 1, 1], [], []>} : vector<8x128xbf16>, vector<128x128xbf16>, vector<8x128xf32> -> vector<8x128xf32>
      %34 = arith.addf %26, %33 : vector<8x128xf32>
      %c1 = arith.constant 1 : index
      %c0_18 = arith.constant 0 : index
      %c0_19 = arith.constant 0 : index
      %35 = vector.load %arg15[%c1, %c0_18, %c0_19] : memref<2x8x128xf32, #tpu.memory_space<vmem>>, vector<1x8x128xf32>
      %36 = vector.shape_cast %35 : vector<1x8x128xf32> to vector<8x128xf32>
      %37 = vector.extract_strided_slice %25 {offsets = [0, 128], sizes = [8, 128], strides = [1, 1]} : vector<8x256xf32> to vector<8x128xf32>
      %38 = arith.mulf %36, %37 : vector<8x128xf32>
      %39 = arith.truncf %38 : vector<8x128xf32> to vector<8x128xbf16>
      %c128 = arith.constant 128 : index
      %c0_20 = arith.constant 0 : index
      %40 = vector.load %arg11[%c128, %c0_20] : memref<256x128xbf16, #tpu.memory_space<vmem>>, vector<128x128xbf16>
      %cst_21 = arith.constant dense<0.000000e+00> : vector<8x128xf32>
      %41 = tpu.matmul %39, %40, %cst_21 {dimension_numbers = #tpu.dot_dimension_numbers<[1], [0], [0], [1], [0, 0, 1, 1], [], []>} : vector<8x128xbf16>, vector<128x128xbf16>, vector<8x128xf32> -> vector<8x128xf32>
      %42 = arith.addf %34, %41 : vector<8x128xf32>
      %c0_22 = arith.constant 0 : index
      %c0_23 = arith.constant 0 : index
      %43 = vector.load %arg12[%c0_22, %c0_23] : memref<1x128xf32, #tpu.memory_space<vmem>>, vector<1x128xf32>
      %44 = vector.broadcast %43 : vector<1x128xf32> to vector<8x128xf32>
      %45 = arith.addf %42, %44 : vector<8x128xf32>
      %c0_24 = arith.constant 0 : index
      %c0_25 = arith.constant 0 : index
      %46 = vector.load %arg13[%c0_24, %c0_25] : memref<8x128xf32, #tpu.memory_space<vmem>>, vector<8x128xf32>
      tpu.vector_store %arg13[%c0_24, %c0_25], %45 {strides = array<i32>} : memref<8x128xf32, #tpu.memory_space<vmem>>, vector<8x128xf32>,
    } else {
    }
    return
  }
  func.func @transform_0(%arg0: i32, %arg1: i32) -> (i32, i32) {
    %c0_i32 = arith.constant 0 : i32
    %c0_i32_0 = arith.constant 0 : i32
    return %arg0, %c0_i32 : i32, i32
  }
  func.func @transform_1(%arg0: i32, %arg1: i32) -> (i32, i32) {
    %c0_i32 = arith.constant 0 : i32
    %c0_i32_0 = arith.constant 0 : i32
    return %arg0, %c0_i32 : i32, i32
  }
  func.func @transform_2(%arg0: i32, %arg1: i32) -> (i32, i32) {
    %c1_i32 = arith.constant 1 : i32
    %0 = arith.minsi %arg1, %c1_i32 : i32
    %c0_i32 = arith.constant 0 : i32
    %c0_i32_0 = arith.constant 0 : i32
    return %c0_i32, %0 : i32, i32
  }
  func.func @transform_3(%arg0: i32, %arg1: i32) -> (i32, i32) {
    %c1_i32 = arith.constant 1 : i32
    %0 = arith.minsi %arg1, %c1_i32 : i32
    %c0_i32 = arith.constant 0 : i32
    %c0_i32_0 = arith.constant 0 : i32
    return %c0_i32, %0 : i32, i32
  }
  func.func @transform_4(%arg0: i32, %arg1: i32) -> (i32, i32) {
    %c1_i32 = arith.constant 1 : i32
    %0 = arith.minsi %arg1, %c1_i32 : i32
    %c0_i32 = arith.constant 0 : i32
    %c0_i32_0 = arith.constant 0 : i32
    return %c0_i32, %0 : i32, i32
  }
  func.func @transform_5(%arg0: i32, %arg1: i32) -> (i32, i32) {
    %c1_i32 = arith.constant 1 : i32
    %0 = arith.minsi %arg1, %c1_i32 : i32
    %c0_i32 = arith.constant 0 : i32
    %c0_i32_0 = arith.constant 0 : i32
    return %c0_i32, %0 : i32, i32
  }
  func.func @transform_6(%arg0: i32, %arg1: i32) -> (i32, i32) {
    %c2_i32 = arith.constant 2 : i32
    %0 = arith.subi %arg1, %c2_i32 : i32
    %c0_i32 = arith.constant 0 : i32
    %1 = arith.maxsi %0, %c0_i32 : i32
    %c0_i32_0 = arith.constant 0 : i32
    %c0_i32_1 = arith.constant 0 : i32
    return %1, %c0_i32_0 : i32, i32
  }
  func.func @transform_7(%arg0: i32, %arg1: i32) -> (i32, i32) {
    %c0_i32 = arith.constant 0 : i32
    %c0_i32_0 = arith.constant 0 : i32
    %c0_i32_1 = arith.constant 0 : i32
    return %c0_i32, %c0_i32_0 : i32, i32
  }
  func.func @transform_8(%arg0: i32, %arg1: i32) -> (i32, i32) {
    %c0_i32 = arith.constant 0 : i32
    %c0_i32_0 = arith.constant 0 : i32
    %c0_i32_1 = arith.constant 0 : i32
    return %c0_i32, %c0_i32_0 : i32, i32
  }
  func.func @transform_9(%arg0: i32, %arg1: i32) -> (i32, i32) {
    %c0_i32 = arith.constant 0 : i32
    %c0_i32_0 = arith.constant 0 : i32
    %c0_i32_1 = arith.constant 0 : i32
    return %c0_i32, %c0_i32_0 : i32, i32
  }
  func.func @transform_10(%arg0: i32, %arg1: i32) -> (i32, i32) {
    %c0_i32 = arith.constant 0 : i32
    %c0_i32_0 = arith.constant 0 : i32
    %c0_i32_1 = arith.constant 0 : i32
    return %c0_i32, %c0_i32_0 : i32, i32
  }
  func.func @transform_11(%arg0: i32, %arg1: i32) -> (i32, i32) {
    %c0_i32 = arith.constant 0 : i32
    %c0_i32_0 = arith.constant 0 : i32
    return %arg0, %c0_i32 : i32, i32
  }
}

</mosaic_0001>

<llo_original>
// kernel: tpu_custom_call.1
$region0: #{tpu_custom_call.1}
  #allocation0 [shape = 'u32[]', space=smem, size = 0x4, offset = 0x4, fixed_abs, tag = 'smem constant byte address 0x4 - core index']
  #allocation1 [shape = 'u32[144,128]{1,0:T(1,128)}', space=vmem, size = 0x12000, scoped, tag = 'internal scratch']
  #allocation2 [shape = 'f32[8,256]{1,0:T(8,128)}', space=vmem, size = 0x2000, scoped, tag = 'scratch operand']
  #allocation3 [shape = 'f32[2,8,128]{2,1,0:T(8,128)}', space=vmem, size = 0x2000, scoped, tag = 'scratch operand']
  %s0 = inlined_call_operand.hbm [shape: bf16[8,128], index: 0, kind: input, shape index: {}]
  %s1 = inlined_call_operand.hbm [shape: bf16[8,128], index: 1, kind: input, shape index: {}]
  %s2 = inlined_call_operand.hbm [shape: s8[128,256], index: 2, kind: input, shape index: {}]
  %s3 = inlined_call_operand.hbm [shape: s8[128,256], index: 3, kind: input, shape index: {}]
  %s4 = inlined_call_operand.vmem [shape: f32[1,256], index: 4, kind: input, shape index: {}]
  %s5 = inlined_call_operand.vmem [shape: f32[1,256], index: 5, kind: input, shape index: {}]
  %s6 = inlined_call_operand.hbm [shape: s8[256,256], index: 6, kind: input, shape index: {}]
  %s7 = inlined_call_operand.vmem [shape: f32[1,256], index: 7, kind: input, shape index: {}]
  %s8 = inlined_call_operand.vmem [shape: f32[1,256], index: 8, kind: input, shape index: {}]
  %s9 = inlined_call_operand.hbm [shape: bf16[256,128], index: 9, kind: input, shape index: {}]
  %s10 = inlined_call_operand.vmem [shape: f32[1,128], index: 10, kind: input, shape index: {}]
  %s11 = inlined_call_operand.hbm [shape: f32[8,128], index: 11, kind: output, shape index: {}]
  %s12 = sld [smem:[#allocation0]]
  $region117: #{tpu_custom_call.1} parent=0
    _
  %s14 = ssub.s32 1, %s12
  %s15 = scalar_select 0, %s14, %s12
  $region1: #{tpu_custom_call.1} parent=0
    #allocation4 [shape = 'u8[2048]{0}', space=vmem, size = 0x800, scoped, tag = 'input window, operand 0, single buffered']
    #allocation5 [shape = 's32[2]{0}', space=sflag, size = 0x8, scoped, tag = 'scoped memory for tpu_custom_call.1']
    #allocation6 [shape = 's32[2]{0}', space=sflag, size = 0x8, scoped, tag = 'scoped memory for tpu_custom_call.1']
    #allocation7 [shape = 'u8[2048]{0}', space=vmem, size = 0x800, scoped, tag = 'input window, operand 1, single buffered']
    #allocation8 [shape = 's32[1]{0}', space=sflag, size = 0x4, scoped, tag = 'scoped memory for tpu_custom_call.1']
    #allocation9 [shape = 'u8[32768]{0}', space=vmem, size = 0x8000, scoped, tag = 'input window, operand 2']
    #allocation10 [shape = 'u8[32768]{0}', space=vmem, size = 0x8000, scoped, tag = 'input window, operand 3']
    #allocation11 [shape = 'u8[65536]{0}', space=vmem, size = 0x10000, scoped, tag = 'input window, operand 6']
    #allocation12 [shape = 'u8[65536]{0}', space=vmem, size = 0x10000, scoped, tag = 'input window, operand 9, single buffered']
    #allocation13 [shape = 'u8[4096]{0}', space=vmem, size = 0x1000, scoped, tag = 'output window, operand 0, single buffered']
    %16 = vsyncpa [#allocation5], 0
    %17 = vsyncpa [#allocation8], 0
    %18 = vsyncpa [#allocation6], 0
    loop: start=0, step=1, limit=6
    $region2: #{tpu_custom_call.1} parent=1 // loop_pre_header
      _
    $region3: #{tpu_custom_call.1} parent=1 // loop_header
      %s20 = sphi 0, %s24
      %p21 = scmp.ge.s32.totalorder %s20, 6
      %s27 = sphi 0, %s39
      %s28 = sphi 0, %s35
      %s29 = sphi 0, %s27
      %s30 = sphi 0, %s28
      %s31 = sphi 0, %s29
      %s32 = sphi 0, %s30
      %s42 = sphi 0, %s44
      %s45 = sphi 0, %s42
      %s46 = sphi 0, %s45
      %s62 = sphi 0, %s46
      %s68 = sphi 0, %s70
      %s71 = sphi 0, %s68
      %s72 = sphi 0, %s71
      %s88 = sphi 0, %s72
      %s98 = sphi 0, %s100
      %s101 = sphi 0, %s98
      %s102 = sphi 0, %s101
      %s118 = sphi 0, %s102
      %s128 = sphi 0, %s130
      %s131 = sphi 0, %s128
      %s132 = sphi 0, %s131
      %s148 = sphi 0, %s132
      %s158 = sphi 0, %s160
      %s161 = sphi 0, %s158
      %s162 = sphi 0, %s161
      %s178 = sphi 0, %s162
      %s188 = sphi 0, %s190
      %s191 = sphi 0, %s188
      %s192 = sphi 0, %s191
      %s208 = sphi 0, %s192
      %s220 = sphi 0, %s222
      %s223 = sphi 0, %s220
      %s224 = sphi 0, %s223
      %s240 = sphi 0, %s224
      %s244 = sphi 0, %s244
      %s246 = sphi 0, %s244
      %s247 = sphi 0, %s246
      %s261 = sphi 0, %s247
      %s265 = sphi 0, %s265
      %s267 = sphi 0, %s265
      %s268 = sphi 0, %s267
      %s282 = sphi 0, %s268
      %s286 = sphi 0, %s286
      %s288 = sphi 0, %s286
      %s289 = sphi 0, %s288
      %s303 = sphi 0, %s289
      %s307 = sphi 0, %s307
      %s309 = sphi 0, %s307
      %s310 = sphi 0, %s309
      %s324 = sphi 0, %s310
      %s330 = sphi 0, %s332
      %s333 = sphi 0, %s330
      %s334 = sphi 0, %s333
      %s350 = sphi 0, %s334
    $region4: #{tpu_custom_call.1} parent=1 // loop_header_branch
      %23 = sbr.rel (%p21) target = $region8
    $region5: #{tpu_custom_call.1} parent=1 // loop_body
      %s25 = ssub.s32 %s20, 1
      %s26 = ssub.s32 %s20, 2
      %s33 = sadd.s32 1, %s28
      %p34 = scmp.ge.s32.totalorder %s33, 4
      %s35 = scalar_select %p34, 0, %s33
      %s36 = sadd.s32 1, %s27
      %s37 = scalar_select %p34, %s36, %s27
      %p38 = scmp.ge.s32.totalorder %s37, 1
      %s39 = scalar_select %p38, 0, %s37
      %s40 = ssub.s32 %s27, %s39
      %p41 = scmp.eq.s32.totalorder %s40, 0
      %s43 = sadd.s32 %s42, 1
      %s44 = scalar_select %p41, %s42, %s43
      %p47 = pneg %p41
      %p48 = scmp.eq.s32.totalorder %s20, 3
      %p49 = por %p47, %p48
      %p50 = scmp.ne.s32.totalorder %s42, %s45
      %p51 = scmp.eq.s32.totalorder %s20, 0
      %p52 = por %p50, %p51
      %p53 = scmp.ne.s32.totalorder %s42, %s45
      %p54 = scmp.eq.s32.totalorder %s25, 3
      %p55 = por %p53, %p54
      %p56 = scmp.ne.s32.totalorder %s45, %s46
      %p57 = scmp.eq.s32.totalorder %s25, 0
      %p58 = por %p56, %p57
      %p59 = scmp.ne.s32.totalorder %s45, %s46
      %p60 = scmp.eq.s32.totalorder %s26, 3
      %p61 = por %p59, %p60
      %p63 = scmp.ne.s32.totalorder %s46, %s62
      %p64 = scmp.eq.s32.totalorder %s26, 0
      %p65 = por %p63, %p64
      %s66 = ssub.s32 %s27, %s39
      %p67 = scmp.eq.s32.totalorder %s66, 0
      %s69 = sadd.s32 %s68, 1
      %s70 = scalar_select %p67, %s68, %s69
      %p73 = pneg %p67
      %p74 = scmp.eq.s32.totalorder %s20, 3
      %p75 = por %p73, %p74
      %p76 = scmp.ne.s32.totalorder %s68, %s71
      %p77 = scmp.eq.s32.totalorder %s20, 0
      %p78 = por %p76, %p77
      %p79 = scmp.ne.s32.totalorder %s68, %s71
      %p80 = scmp.eq.s32.totalorder %s25, 3
      %p81 = por %p79, %p80
      %p82 = scmp.ne.s32.totalorder %s71, %s72
      %p83 = scmp.eq.s32.totalorder %s25, 0
      %p84 = por %p82, %p83
      %p85 = scmp.ne.s32.totalorder %s71, %s72
      %p86 = scmp.eq.s32.totalorder %s26, 3
      %p87 = por %p85, %p86
      %p89 = scmp.ne.s32.totalorder %s72, %s88
      %p90 = scmp.eq.s32.totalorder %s26, 0
      %p91 = por %p89, %p90
      %p92 = scmp.lt.s32.totalorder %s28, 1
      %s93 = scalar_select %p92, %s28, 1
      %p94 = scmp.lt.s32.totalorder %s35, 1
      %s95 = scalar_select %p94, %s35, 1
      %s96 = ssub.s32 %s93, %s95
      %p97 = scmp.eq.s32.totalorder %s96, 0
      %s99 = sadd.s32 %s98, 1
      %s100 = scalar_select %p97, %s98, %s99
      %p103 = pneg %p97
      %p104 = scmp.eq.s32.totalorder %s20, 3
      %p105 = por %p103, %p104
      %p106 = scmp.ne.s32.totalorder %s98, %s101
      %p107 = scmp.eq.s32.totalorder %s20, 0
      %p108 = por %p106, %p107
      %p109 = scmp.ne.s32.totalorder %s98, %s101
      %p110 = scmp.eq.s32.totalorder %s25, 3
      %p111 = por %p109, %p110
      %p112 = scmp.ne.s32.totalorder %s101, %s102
      %p113 = scmp.eq.s32.totalorder %s25, 0
      %p114 = por %p112, %p113
      %p115 = scmp.ne.s32.totalorder %s101, %s102
      %p116 = scmp.eq.s32.totalorder %s26, 3
      %p117 = por %p115, %p116
      %p119 = scmp.ne.s32.totalorder %s102, %s118
      %p120 = scmp.eq.s32.totalorder %s26, 0
      %p121 = por %p119, %p120
      %p122 = scmp.lt.s32.totalorder %s28, 1
      %s123 = scalar_select %p122, %s28, 1
      %p124 = scmp.lt.s32.totalorder %s35, 1
      %s125 = scalar_select %p124, %s35, 1
      %s126 = ssub.s32 %s123, %s125
      %p127 = scmp.eq.s32.totalorder %s126, 0
      %s129 = sadd.s32 %s128, 1
      %s130 = scalar_select %p127, %s128, %s129
      %p133 = pneg %p127
      %p134 = scmp.eq.s32.totalorder %s20, 3
      %p135 = por %p133, %p134
      %p136 = scmp.ne.s32.totalorder %s128, %s131
      %p137 = scmp.eq.s32.totalorder %s20, 0
      %p138 = por %p136, %p137
      %p139 = scmp.ne.s32.totalorder %s128, %s131
      %p140 = scmp.eq.s32.totalorder %s25, 3
      %p141 = por %p139, %p140
      %p142 = scmp.ne.s32.totalorder %s131, %s132
      %p143 = scmp.eq.s32.totalorder %s25, 0
      %p144 = por %p142, %p143
      %p145 = scmp.ne.s32.totalorder %s131, %s132
      %p146 = scmp.eq.s32.totalorder %s26, 3
      %p147 = por %p145, %p146
      %p149 = scmp.ne.s32.totalorder %s132, %s148
      %p150 = scmp.eq.s32.totalorder %s26, 0
      %p151 = por %p149, %p150
      %p152 = scmp.lt.s32.totalorder %s28, 1
      %s153 = scalar_select %p152, %s28, 1
      %p154 = scmp.lt.s32.totalorder %s35, 1
      %s155 = scalar_select %p154, %s35, 1
      %s156 = ssub.s32 %s153, %s155
      %p157 = scmp.eq.s32.totalorder %s156, 0
      %s159 = sadd.s32 %s158, 1
      %s160 = scalar_select %p157, %s158, %s159
      %p163 = pneg %p157
      %p164 = scmp.eq.s32.totalorder %s20, 3
      %p165 = por %p163, %p164
      %p166 = scmp.ne.s32.totalorder %s158, %s161
      %p167 = scmp.eq.s32.totalorder %s20, 0
      %p168 = por %p166, %p167
      %p169 = scmp.ne.s32.totalorder %s158, %s161
      %p170 = scmp.eq.s32.totalorder %s25, 3
      %p171 = por %p169, %p170
      %p172 = scmp.ne.s32.totalorder %s161, %s162
      %p173 = scmp.eq.s32.totalorder %s25, 0
      %p174 = por %p172, %p173
      %p175 = scmp.ne.s32.totalorder %s161, %s162
      %p176 = scmp.eq.s32.totalorder %s26, 3
      %p177 = por %p175, %p176
      %p179 = scmp.ne.s32.totalorder %s162, %s178
      %p180 = scmp.eq.s32.totalorder %s26, 0
      %p181 = por %p179, %p180
      %p182 = scmp.lt.s32.totalorder %s28, 1
      %s183 = scalar_select %p182, %s28, 1
      %p184 = scmp.lt.s32.totalorder %s35, 1
      %s185 = scalar_select %p184, %s35, 1
      %s186 = ssub.s32 %s183, %s185
      %p187 = scmp.eq.s32.totalorder %s186, 0
      %s189 = sadd.s32 %s188, 1
      %s190 = scalar_select %p187, %s188, %s189
      %p193 = pneg %p187
      %p194 = scmp.eq.s32.totalorder %s20, 3
      %p195 = por %p193, %p194
      %p196 = scmp.ne.s32.totalorder %s188, %s191
      %p197 = scmp.eq.s32.totalorder %s20, 0
      %p198 = por %p196, %p197
      %p199 = scmp.ne.s32.totalorder %s188, %s191
      %p200 = scmp.eq.s32.totalorder %s25, 3
      %p201 = por %p199, %p200
      %p202 = scmp.ne.s32.totalorder %s191, %s192
      %p203 = scmp.eq.s32.totalorder %s25, 0
      %p204 = por %p202, %p203
      %p205 = scmp.ne.s32.totalorder %s191, %s192
      %p206 = scmp.eq.s32.totalorder %s26, 3
      %p207 = por %p205, %p206
      %p209 = scmp.ne.s32.totalorder %s192, %s208
      %p210 = scmp.eq.s32.totalorder %s26, 0
      %p211 = por %p209, %p210
      %s212 = ssub.s32 %s28, 2
      %p213 = scmp.gt.s32.totalorder %s212, 0
      %s214 = scalar_select %p213, %s212, 0
      %s215 = ssub.s32 %s35, 2
      %p216 = scmp.gt.s32.totalorder %s215, 0
      %s217 = scalar_select %p216, %s215, 0
      %s218 = ssub.s32 %s214, %s217
      %p219 = scmp.eq.s32.totalorder %s218, 0
      %s221 = sadd.s32 %s220, 1
      %s222 = scalar_select %p219, %s220, %s221
      %p225 = pneg %p219
      %p226 = scmp.eq.s32.totalorder %s20, 3
      %p227 = por %p225, %p226
      %p228 = scmp.ne.s32.totalorder %s220, %s223
      %p229 = scmp.eq.s32.totalorder %s20, 0
      %p230 = por %p228, %p229
      %p231 = scmp.ne.s32.totalorder %s220, %s223
      %p232 = scmp.eq.s32.totalorder %s25, 3
      %p233 = por %p231, %p232
      %p234 = scmp.ne.s32.totalorder %s223, %s224
      %p235 = scmp.eq.s32.totalorder %s25, 0
      %p236 = por %p234, %p235
      %p237 = scmp.ne.s32.totalorder %s223, %s224
      %p238 = scmp.eq.s32.totalorder %s26, 3
      %p239 = por %p237, %p238
      %p241 = scmp.ne.s32.totalorder %s224, %s240
      %p242 = scmp.eq.s32.totalorder %s26, 0
      %p243 = por %p241, %p242
      %s245 = sadd.s32 %s244, 1
      %p248 = scmp.eq.s32.totalorder %s20, 3
      %p249 = scmp.ne.s32.totalorder %s244, %s246
      %p250 = scmp.eq.s32.totalorder %s20, 0
      %p251 = por %p249, %p250
      %p252 = scmp.ne.s32.totalorder %s244, %s246
      %p253 = scmp.eq.s32.totalorder %s25, 3
      %p254 = por %p252, %p253
      %p255 = scmp.ne.s32.totalorder %s246, %s247
      %p256 = scmp.eq.s32.totalorder %s25, 0
      %p257 = por %p255, %p256
      %p258 = scmp.ne.s32.totalorder %s246, %s247
      %p259 = scmp.eq.s32.totalorder %s26, 3
      %p260 = por %p258, %p259
      %p262 = scmp.ne.s32.totalorder %s247, %s261
      %p263 = scmp.eq.s32.totalorder %s26, 0
      %p264 = por %p262, %p263
      %s266 = sadd.s32 %s265, 1
      %p269 = scmp.eq.s32.totalorder %s20, 3
      %p270 = scmp.ne.s32.totalorder %s265, %s267
      %p271 = scmp.eq.s32.totalorder %s20, 0
      %p272 = por %p270, %p271
      %p273 = scmp.ne.s32.totalorder %s265, %s267
      %p274 = scmp.eq.s32.totalorder %s25, 3
      %p275 = por %p273, %p274
      %p276 = scmp.ne.s32.totalorder %s267, %s268
      %p277 = scmp.eq.s32.totalorder %s25, 0
      %p278 = por %p276, %p277
      %p279 = scmp.ne.s32.totalorder %s267, %s268
      %p280 = scmp.eq.s32.totalorder %s26, 3
      %p281 = por %p279, %p280
      %p283 = scmp.ne.s32.totalorder %s268, %s282
      %p284 = scmp.eq.s32.totalorder %s26, 0
      %p285 = por %p283, %p284
      %s287 = sadd.s32 %s286, 1
      %p290 = scmp.eq.s32.totalorder %s20, 3
      %p291 = scmp.ne.s32.totalorder %s286, %s288
      %p292 = scmp.eq.s32.totalorder %s20, 0
      %p293 = por %p291, %p292
      %p294 = scmp.ne.s32.totalorder %s286, %s288
      %p295 = scmp.eq.s32.totalorder %s25, 3
      %p296 = por %p294, %p295
      %p297 = scmp.ne.s32.totalorder %s288, %s289
      %p298 = scmp.eq.s32.totalorder %s25, 0
      %p299 = por %p297, %p298
      %p300 = scmp.ne.s32.totalorder %s288, %s289
      %p301 = scmp.eq.s32.totalorder %s26, 3
      %p302 = por %p300, %p301
      %p304 = scmp.ne.s32.totalorder %s289, %s303
      %p305 = scmp.eq.s32.totalorder %s26, 0
      %p306 = por %p304, %p305
      %s308 = sadd.s32 %s307, 1
      %p311 = scmp.eq.s32.totalorder %s20, 3
      %p312 = scmp.ne.s32.totalorder %s307, %s309
      %p313 = scmp.eq.s32.totalorder %s20, 0
      %p314 = por %p312, %p313
      %p315 = scmp.ne.s32.totalorder %s307, %s309
      %p316 = scmp.eq.s32.totalorder %s25, 3
      %p317 = por %p315, %p316
      %p318 = scmp.ne.s32.totalorder %s309, %s310
      %p319 = scmp.eq.s32.totalorder %s25, 0
      %p320 = por %p318, %p319
      %p321 = scmp.ne.s32.totalorder %s309, %s310
      %p322 = scmp.eq.s32.totalorder %s26, 3
      %p323 = por %p321, %p322
      %p325 = scmp.ne.s32.totalorder %s310, %s324
      %p326 = scmp.eq.s32.totalorder %s26, 0
      %p327 = por %p325, %p326
      %s328 = ssub.s32 %s27, %s39
      %p329 = scmp.eq.s32.totalorder %s328, 0
      %s331 = sadd.s32 %s330, 1
      %s332 = scalar_select %p329, %s330, %s331
      %p335 = pneg %p329
      %p336 = scmp.eq.s32.totalorder %s20, 3
      %p337 = por %p335, %p336
      %p338 = scmp.ne.s32.totalorder %s330, %s333
      %p339 = scmp.eq.s32.totalorder %s20, 0
      %p340 = por %p338, %p339
      %p341 = scmp.ne.s32.totalorder %s330, %s333
      %p342 = scmp.eq.s32.totalorder %s25, 3
      %p343 = por %p341, %p342
      %p344 = scmp.ne.s32.totalorder %s333, %s334
      %p345 = scmp.eq.s32.totalorder %s25, 0
      %p346 = por %p344, %p345
      %p347 = scmp.ne.s32.totalorder %s333, %s334
      %p348 = scmp.eq.s32.totalorder %s26, 3
      %p349 = por %p347, %p348
      %p351 = scmp.ne.s32.totalorder %s334, %s350
      %p352 = scmp.eq.s32.totalorder %s26, 0
      %p353 = por %p351, %p352
      %p354 = scmp.le.s32.totalorder 1, %s20
      %p355 = scmp.lt.s32.totalorder %s20, 5
      %p356 = pnand %p354, %p355
      %p357 = pneg %p356
      // Predicated region
      $region9: #{tpu_custom_call.1} parent=5 // pred_check
        _
      $region10: #{tpu_custom_call.1} parent=5 // pred_check_branch
        %359 = sbr.rel (%p356) target = $region12
      $region11: #{tpu_custom_call.1} parent=5 // pred_region
        %s360 = ssub.s32 %s20, 1
        // Predicated region
        $region13: #{tpu_custom_call.1} parent=11 // pred_check
          %p361 = pneg %p58
        $region14: #{tpu_custom_call.1} parent=11 // pred_check_branch
          %363 = sbr.rel (%p361) target = $region16
        $region15: #{tpu_custom_call.1} parent=11 // pred_region
          %s365 = ssub.s32 64, 64
          %366 = vsyncadd [#allocation5], %s365
          %s367 = smul.addr %s29, 64
          %s368 = scalar_lea.hbm %s0, %s367
          %s370 = sshll.u32 [#allocation4], 4
          %s371 = int_to_ptr.vmem [resolvable:$true] %s370
          %373 = dma.hbm_to_vmem [thread:$0]  %s368, 64, %s371, [#allocation5]
        $region16: #{tpu_custom_call.1} parent=11 // pred_fallthru
          _
        // Predicated region
        $region17: #{tpu_custom_call.1} parent=11 // pred_check
          %p374 = pneg %p84
        $region18: #{tpu_custom_call.1} parent=11 // pred_check_branch
          %376 = sbr.rel (%p374) target = $region20
        $region19: #{tpu_custom_call.1} parent=11 // pred_region
          %s378 = ssub.s32 64, 64
          %379 = vsyncadd [#allocation8], %s378
          %s380 = smul.addr %s29, 64
          %s381 = scalar_lea.hbm %s1, %s380
          %s383 = sshll.u32 [#allocation7], 4
          %s384 = int_to_ptr.vmem [resolvable:$true] %s383
          %386 = dma.hbm_to_vmem [thread:$0]  %s381, 64, %s384, [#allocation8]
        $region20: #{tpu_custom_call.1} parent=11 // pred_fallthru
          _
        // Predicated region
        $region21: #{tpu_custom_call.1} parent=11 // pred_check
          %p387 = pneg %p257
        $region22: #{tpu_custom_call.1} parent=11 // pred_check_branch
          %389 = sbr.rel (%p387) target = $region24
        $region23: #{tpu_custom_call.1} parent=11 // pred_region
          _
        $region24: #{tpu_custom_call.1} parent=11 // pred_fallthru
          _
        // Predicated region
        $region25: #{tpu_custom_call.1} parent=11 // pred_check
          %p390 = pneg %p278
        $region26: #{tpu_custom_call.1} parent=11 // pred_check_branch
          %392 = sbr.rel (%p390) target = $region28
        $region27: #{tpu_custom_call.1} parent=11 // pred_region
          _
        $region28: #{tpu_custom_call.1} parent=11 // pred_fallthru
          _
        // Predicated region
        $region29: #{tpu_custom_call.1} parent=11 // pred_check
          %p393 = pneg %p299
        $region30: #{tpu_custom_call.1} parent=11 // pred_check_branch
          %395 = sbr.rel (%p393) target = $region32
        $region31: #{tpu_custom_call.1} parent=11 // pred_region
          %s397 = ssub.s32 2048, 2048
          %398 = vsyncadd [#allocation8], %s397
          %s399 = sshll.u32 [#allocation12], 4
          %s400 = int_to_ptr.vmem [resolvable:$true] %s399
          %405 = dma.hbm_to_vmem [thread:$0]  %s9, 2048, %s400, [#allocation8], 64, 64, 4
        $region32: #{tpu_custom_call.1} parent=11 // pred_fallthru
          _
        // Predicated region
        $region33: #{tpu_custom_call.1} parent=11 // pred_check
          %p406 = pneg %p320
        $region34: #{tpu_custom_call.1} parent=11 // pred_check_branch
          %408 = sbr.rel (%p406) target = $region36
        $region35: #{tpu_custom_call.1} parent=11 // pred_region
          _
        $region36: #{tpu_custom_call.1} parent=11 // pred_fallthru
          _
      $region12: #{tpu_custom_call.1} parent=5 // pred_fallthru
        _
      %p409 = scmp.lt.s32.totalorder %s20, 4
      // Predicated region
      $region37: #{tpu_custom_call.1} parent=5 // pred_check
        %p410 = pneg %p409
      $region38: #{tpu_custom_call.1} parent=5 // pred_check_branch
        %412 = sbr.rel (%p410) target = $region40
      $region39: #{tpu_custom_call.1} parent=5 // pred_region
        // Predicated region
        $region41: #{tpu_custom_call.1} parent=39 // pred_check
          %p413 = pneg %p108
        $region42: #{tpu_custom_call.1} parent=39 // pred_check_branch
          %415 = sbr.rel (%p413) target = $region44
        $region43: #{tpu_custom_call.1} parent=39 // pred_region
          %s416 = sand.u32 %s20, 1
          %s417 = scalar_lea.sflag [#allocation5], %s416
          %s418 = sand.u32 %s98, 1
          %s419 = smul.addr %s418, 32
          %s420 = scalar_lea.vmem [#allocation9], %s419
          %p421 = scmp.lt.s32.totalorder %s28, 1
          %s422 = scalar_select %p421, %s28, 1
          %s424 = ssub.s32 512, 512
          %425 = vsyncadd %s417, %s424
          %s426 = smul.addr %s422, 128
          %s427 = scalar_lea.hbm %s2, %s426
          %s428 = sshll.u32 %s420, 4
          %s429 = int_to_ptr.vmem [resolvable:$true] %s428
          %434 = dma.hbm_to_vmem [thread:$0]  %s427, 512, %s429, %s417, 256, 128, 8
        $region44: #{tpu_custom_call.1} parent=39 // pred_fallthru
          _
        // Predicated region
        $region45: #{tpu_custom_call.1} parent=39 // pred_check
          %p435 = pneg %p138
        $region46: #{tpu_custom_call.1} parent=39 // pred_check_branch
          %437 = sbr.rel (%p435) target = $region48
        $region47: #{tpu_custom_call.1} parent=39 // pred_region
          %s438 = sand.u32 %s20, 1
          %s439 = scalar_lea.sflag [#allocation5], %s438
          %s440 = sand.u32 %s128, 1
          %s441 = smul.addr %s440, 32
          %s442 = scalar_lea.vmem [#allocation10], %s441
          %p443 = scmp.lt.s32.totalorder %s28, 1
          %s444 = scalar_select %p443, %s28, 1
          %s446 = ssub.s32 512, 512
          %447 = vsyncadd %s439, %s446
          %s448 = smul.addr %s444, 128
          %s449 = scalar_lea.hbm %s3, %s448
          %s450 = sshll.u32 %s442, 4
          %s451 = int_to_ptr.vmem [resolvable:$true] %s450
          %456 = dma.hbm_to_vmem [thread:$0]  %s449, 512, %s451, %s439, 256, 128, 8
        $region48: #{tpu_custom_call.1} parent=39 // pred_fallthru
          _
        // Predicated region
        $region49: #{tpu_custom_call.1} parent=39 // pred_check
          %p457 = pneg %p168
        $region50: #{tpu_custom_call.1} parent=39 // pred_check_branch
          %459 = sbr.rel (%p457) target = $region52
        $region51: #{tpu_custom_call.1} parent=39 // pred_region
          %p460 = scmp.lt.s32.totalorder %s28, 1
          %s461 = scalar_select %p460, %s28, 1
          %p462 = scmp.lt.s32.totalorder %s461, 1
          %s463 = scalar_select %p462, %s461, 1
          %s464 = scalar_lea.vmem %s4, %s463
          %p465 = scmp.lt.s32.totalorder %s28, 1
          %s466 = scalar_select %p465, %s28, 1
        $region52: #{tpu_custom_call.1} parent=39 // pred_fallthru
          _
        // Predicated region
        $region53: #{tpu_custom_call.1} parent=39 // pred_check
          %p467 = pneg %p198
        $region54: #{tpu_custom_call.1} parent=39 // pred_check_branch
          %469 = sbr.rel (%p467) target = $region56
        $region55: #{tpu_custom_call.1} parent=39 // pred_region
          %p470 = scmp.lt.s32.totalorder %s28, 1
          %s471 = scalar_select %p470, %s28, 1
          %p472 = scmp.lt.s32.totalorder %s471, 1
          %s473 = scalar_select %p472, %s471, 1
          %s474 = scalar_lea.vmem %s5, %s473
          %p475 = scmp.lt.s32.totalorder %s28, 1
          %s476 = scalar_select %p475, %s28, 1
        $region56: #{tpu_custom_call.1} parent=39 // pred_fallthru
          _
        // Predicated region
        $region57: #{tpu_custom_call.1} parent=39 // pred_check
          %p477 = pneg %p230
        $region58: #{tpu_custom_call.1} parent=39 // pred_check_branch
          %479 = sbr.rel (%p477) target = $region60
        $region59: #{tpu_custom_call.1} parent=39 // pred_region
          %s480 = sand.u32 %s20, 1
          %s481 = scalar_lea.sflag [#allocation5], %s480
          %s482 = sand.u32 %s220, 1
          %s483 = smul.addr %s482, 64
          %s484 = scalar_lea.vmem [#allocation11], %s483
          %s485 = ssub.s32 %s28, 2
          %p486 = scmp.gt.s32.totalorder %s485, 0
          %s487 = scalar_select %p486, %s485, 0
          %s488 = smul.u32 4, %s487
          %s490 = ssub.s32 1024, 1024
          %491 = vsyncadd %s481, %s490
          %s492 = smul.addr %s488, 2
          %s493 = smul.addr %s492, 128
          %s494 = scalar_lea.hbm %s6, %s493
          %s495 = sshll.u32 %s484, 4
          %s496 = int_to_ptr.vmem [resolvable:$true] %s495
          %501 = dma.hbm_to_vmem [thread:$0]  %s494, 1024, %s496, %s481, 256, 256, 16
        $region60: #{tpu_custom_call.1} parent=39 // pred_fallthru
          _
      $region40: #{tpu_custom_call.1} parent=5 // pred_fallthru
        _
      %p502 = scmp.le.s32.totalorder 1, %s20
      %p503 = scmp.lt.s32.totalorder %s20, 5
      %p504 = pnand %p502, %p503
      %p505 = pneg %p504
      // Predicated region
      $region61: #{tpu_custom_call.1} parent=5 // pred_check
        _
      $region62: #{tpu_custom_call.1} parent=5 // pred_check_branch
        %507 = sbr.rel (%p504) target = $region64
      $region63: #{tpu_custom_call.1} parent=5 // pred_region
        %s508 = ssub.s32 %s20, 1
        // Predicated region
        $region65: #{tpu_custom_call.1} parent=63 // pred_check
          %p509 = pneg %p58
        $region66: #{tpu_custom_call.1} parent=63 // pred_check_branch
          %511 = sbr.rel (%p509) target = $region68
        $region67: #{tpu_custom_call.1} parent=63 // pred_region
          %512 = dma.done [#allocation5], 64
        $region68: #{tpu_custom_call.1} parent=63 // pred_fallthru
          _
        // Predicated region
        $region69: #{tpu_custom_call.1} parent=63 // pred_check
          %p513 = pneg %p84
        $region70: #{tpu_custom_call.1} parent=63 // pred_check_branch
          %515 = sbr.rel (%p513) target = $region72
        $region71: #{tpu_custom_call.1} parent=63 // pred_region
          %516 = dma.done [#allocation8], 64
        $region72: #{tpu_custom_call.1} parent=63 // pred_fallthru
          _
        %s517 = sand.u32 %s25, 1
        %s518 = scalar_lea.sflag [#allocation5], %s517
        %s519 = sand.u32 %s101, 1
        %s520 = smul.addr %s519, 32
        %s521 = scalar_lea.vmem [#allocation9], %s520
        // Predicated region
        $region73: #{tpu_custom_call.1} parent=63 // pred_check
          %p522 = pneg %p114
        $region74: #{tpu_custom_call.1} parent=63 // pred_check_branch
          %524 = sbr.rel (%p522) target = $region76
        $region75: #{tpu_custom_call.1} parent=63 // pred_region
          %525 = dma.done %s518, 512
        $region76: #{tpu_custom_call.1} parent=63 // pred_fallthru
          _
        %s526 = sand.u32 %s25, 1
        %s527 = scalar_lea.sflag [#allocation5], %s526
        %s528 = sand.u32 %s131, 1
        %s529 = smul.addr %s528, 32
        %s530 = scalar_lea.vmem [#allocation10], %s529
        // Predicated region
        $region77: #{tpu_custom_call.1} parent=63 // pred_check
          %p531 = pneg %p144
        $region78: #{tpu_custom_call.1} parent=63 // pred_check_branch
          %533 = sbr.rel (%p531) target = $region80
        $region79: #{tpu_custom_call.1} parent=63 // pred_region
          %534 = dma.done %s527, 512
        $region80: #{tpu_custom_call.1} parent=63 // pred_fallthru
          _
        %s535 = sand.u32 %s25, 1
        %s536 = scalar_lea.sflag [#allocation5], %s535
        %s537 = sand.u32 %s223, 1
        %s538 = smul.addr %s537, 64
        %s539 = scalar_lea.vmem [#allocation11], %s538
        // Predicated region
        $region81: #{tpu_custom_call.1} parent=63 // pred_check
          %p540 = pneg %p236
        $region82: #{tpu_custom_call.1} parent=63 // pred_check_branch
          %542 = sbr.rel (%p540) target = $region84
        $region83: #{tpu_custom_call.1} parent=63 // pred_region
          %543 = dma.done %s536, 1024
        $region84: #{tpu_custom_call.1} parent=63 // pred_fallthru
          _
        // Predicated region
        $region85: #{tpu_custom_call.1} parent=63 // pred_check
          %p544 = pneg %p299
        $region86: #{tpu_custom_call.1} parent=63 // pred_check_branch
          %546 = sbr.rel (%p544) target = $region88
        $region87: #{tpu_custom_call.1} parent=63 // pred_region
          %547 = dma.done [#allocation8], 2048
        $region88: #{tpu_custom_call.1} parent=63 // pred_fallthru
          _
        %p548 = pneg %p58
        %p549 = pneg %p55
        %p550 = pneg %p84
        %p551 = pneg %p81
        %s552 = sand.u32 %s25, 1
        %s553 = scalar_lea.sflag [#allocation5], %s552
        %s554 = sand.u32 %s101, 1
        %s555 = smul.addr %s554, 32
        %s556 = scalar_lea.vmem [#allocation9], %s555
        %p557 = pneg %p114
        %p558 = pneg %p111
        %s559 = sand.u32 %s25, 1
        %s560 = scalar_lea.sflag [#allocation5], %s559
        %s561 = sand.u32 %s131, 1
        %s562 = smul.addr %s561, 32
        %s563 = scalar_lea.vmem [#allocation10], %s562
        %p564 = pneg %p144
        %p565 = pneg %p141
        %p566 = scmp.lt.s32.totalorder %s30, 1
        %s567 = scalar_select %p566, %s30, 1
        %p568 = scmp.lt.s32.totalorder %s567, 1
        %s569 = scalar_select %p568, %s567, 1
        %s570 = scalar_lea.vmem %s4, %s569
        %p571 = pneg %p174
        %p572 = pneg %p171
        %p573 = scmp.lt.s32.totalorder %s30, 1
        %s574 = scalar_select %p573, %s30, 1
        %p575 = scmp.lt.s32.totalorder %s574, 1
        %s576 = scalar_select %p575, %s574, 1
        %s577 = scalar_lea.vmem %s5, %s576
        %p578 = pneg %p204
        %p579 = pneg %p201
        %s580 = sand.u32 %s25, 1
        %s581 = scalar_lea.sflag [#allocation5], %s580
        %s582 = sand.u32 %s223, 1
        %s583 = smul.addr %s582, 64
        %s584 = scalar_lea.vmem [#allocation11], %s583
        %p585 = pneg %p236
        %p586 = pneg %p233
        %p587 = pneg %p257
        %p588 = pneg %p254
        %p589 = pneg %p278
        %p590 = pneg %p275
        %p591 = pneg %p299
        %p592 = pneg %p296
        %p593 = pneg %p320
        %p594 = pneg %p317
        %p595 = pneg %p346
        %p596 = pneg %p343
        %p597 = scmp.lt.s32.totalorder %s30, 1
        %s598 = scalar_select %p597, %s30, 1
        %p599 = scmp.lt.s32.totalorder %s30, 1
        %s600 = scalar_select %p599, %s30, 1
        %p601 = scmp.lt.s32.totalorder %s30, 1
        %s602 = scalar_select %p601, %s30, 1
        %p603 = scmp.lt.s32.totalorder %s602, 1
        %s604 = scalar_select %p603, %s602, 1
        %s605 = scalar_lea.vmem %s4, %s604
        %p606 = scmp.lt.s32.totalorder %s30, 1
        %s607 = scalar_select %p606, %s30, 1
        %p608 = scmp.lt.s32.totalorder %s30, 1
        %s609 = scalar_select %p608, %s30, 1
        %p610 = scmp.lt.s32.totalorder %s609, 1
        %s611 = scalar_select %p610, %s609, 1
        %s612 = scalar_lea.vmem %s5, %s611
        %p613 = scmp.lt.s32.totalorder %s30, 1
        %s614 = scalar_select %p613, %s30, 1
        %s615 = ssub.s32 %s30, 2
        %p616 = scmp.gt.s32.totalorder %s615, 0
        %s617 = scalar_select %p616, %s615, 0
        %s618 = smul.u32 4, %s617
        %p620 = scmp.eq.s32.totalorder %s30, 0
        // Predicated region
        $region89: #{tpu_custom_call.1} parent=63 // pred_check
          %p621 = pneg %p620
        $region90: #{tpu_custom_call.1} parent=63 // pred_check_branch
          %623 = sbr.rel (%p621) target = $region92
        $region91: #{tpu_custom_call.1} parent=63 // pred_region
          %624 = vst [vmem:[#allocation2] sm:$0xff] 0.0
          %625 = vst [vmem:[#allocation2 + $0x8] sm:$0xff] 0.0
        $region92: #{tpu_custom_call.1} parent=63 // pred_fallthru
          _
        %p626 = scmp.lt.s32.totalorder %s30, 2
        // Predicated region
        $region93: #{tpu_custom_call.1} parent=63 // pred_check
          %p627 = pneg %p626
        $region94: #{tpu_custom_call.1} parent=63 // pred_check_branch
          %629 = sbr.rel (%p627) target = $region96
        $region95: #{tpu_custom_call.1} parent=63 // pred_region
          %v630 = vld [vmem:[#allocation4] sm:$0xf]
          %v631 = vld [vmem:[%s521] sm:$0xff]
          %v632 = vld [vmem:[%s521 + $0x8] sm:$0xff]
          %v633 = vld [vmem:[%s521 + $0x10] sm:$0xff]
          %v634 = vld [vmem:[%s521 + $0x18] sm:$0xff]
          %v635 = vunpack.c.l.s8.bf16 %v631
          %v636 = vunpack.c.h.s8.bf16 %v631
          %v637 = vunpack.c.l.s8.bf16 %v632
          %v638 = vunpack.c.h.s8.bf16 %v632
          %v639 = vunpack.c.l.s8.bf16 %v633
          %v640 = vunpack.c.h.s8.bf16 %v633
          %v641 = vunpack.c.l.s8.bf16 %v634
          %v642 = vunpack.c.h.s8.bf16 %v634
          %v643 = vld [vmem:[#allocation7] sm:$0xf]
          %v644 = vld [vmem:[%s530] sm:$0xff]
          %v645 = vld [vmem:[%s530 + $0x8] sm:$0xff]
          %v646 = vld [vmem:[%s530 + $0x10] sm:$0xff]
          %v647 = vld [vmem:[%s530 + $0x18] sm:$0xff]
          %v648 = vunpack.c.l.s8.bf16 %v644
          %v649 = vunpack.c.h.s8.bf16 %v644
          %v650 = vunpack.c.l.s8.bf16 %v645
          %v651 = vunpack.c.h.s8.bf16 %v645
          %v652 = vunpack.c.l.s8.bf16 %v646
          %v653 = vunpack.c.h.s8.bf16 %v646
          %v654 = vunpack.c.l.s8.bf16 %v647
          %v655 = vunpack.c.h.s8.bf16 %v647
          %656 = vmatprep.subr.bf16.mxu0 0
          %657 = vmatpush1.bf16.msra.mxu0 %v648
          %658 = vmatprep.subr.bf16.mxu0 0
          %659 = vmatpush1.bf16.msra.mxu0 %v649
          %660 = vmatprep.subr.bf16.mxu0 0
          %661 = vmatpush1.bf16.msra.mxu0 %v650
          %662 = vmatprep.subr.bf16.mxu0 0
          %663 = vmatpush1.bf16.msra.mxu0 %v651
          %664 = vmatprep.subr.bf16.mxu0 0
          %665 = vmatpush1.bf16.msra.mxu0 %v652
          %666 = vmatprep.subr.bf16.mxu0 0
          %667 = vmatpush1.bf16.msra.mxu0 %v653
          %668 = vmatprep.subr.bf16.mxu0 0
          %669 = vmatpush1.bf16.msra.mxu0 %v654
          %670 = vmatprep.subr.bf16.mxu0 0
          %671 = vmatpush1.bf16.msra.mxu0 %v655
          %672 = vmatprep.subr.bf16.mxu0 0
          %673 = vmatpush1.bf16.msra.mxu0 0
          %674 = vmatprep.subr.bf16.mxu0 0
          %675 = vmatpush1.bf16.msra.mxu0 0
          %676 = vmatprep.subr.bf16.mxu0 0
          %677 = vmatpush1.bf16.msra.mxu0 0
          %678 = vmatprep.subr.bf16.mxu0 0
          %679 = vmatpush1.bf16.msra.mxu0 0
          %680 = vmatprep.subr.bf16.mxu0 0
          %681 = vmatpush1.bf16.msra.mxu0 0
          %682 = vmatprep.subr.bf16.mxu0 0
          %683 = vmatpush1.bf16.msra.mxu0 0
          %684 = vmatprep.subr.bf16.mxu0 0
          %685 = vmatpush1.bf16.msra.mxu0 0
          %686 = vmatprep.subr.bf16.mxu0 0
          %687 = vmatpush1.bf16.msra.mxu0 0
          %688 = vmatprep.mubr.bf16.mxu0 0
          %689 = vmatmul.mubr.bf16.gmra.mrb[0].mxu0 %v643
          %v690 = vpop.f32.mrb[0].mxu0
          %v691 = vadd.f32 0.0, %v690
          %v692 = vpop.f32.mrb[0].mxu0
          %v693 = vpop.f32.mrb[0].mxu0
          %v694 = vpop.f32.mrb[0].mxu0
          %695 = vdwg.mxu0
          %696 = vmatprep.subr.bf16.mxu0 0
          %697 = vmatpush1.bf16.msra.mxu0 %v635
          %698 = vmatprep.subr.bf16.mxu0 0
          %699 = vmatpush1.bf16.msra.mxu0 %v636
          %700 = vmatprep.subr.bf16.mxu0 0
          %701 = vmatpush1.bf16.msra.mxu0 %v637
          %702 = vmatprep.subr.bf16.mxu0 0
          %703 = vmatpush1.bf16.msra.mxu0 %v638
          %704 = vmatprep.subr.bf16.mxu0 0
          %705 = vmatpush1.bf16.msra.mxu0 %v639
          %706 = vmatprep.subr.bf16.mxu0 0
          %707 = vmatpush1.bf16.msra.mxu0 %v640
          %708 = vmatprep.subr.bf16.mxu0 0
          %709 = vmatpush1.bf16.msra.mxu0 %v641
          %710 = vmatprep.subr.bf16.mxu0 0
          %711 = vmatpush1.bf16.msra.mxu0 %v642
          %712 = vmatprep.subr.bf16.mxu0 0
          %713 = vmatpush1.bf16.msra.mxu0 0
          %714 = vmatprep.subr.bf16.mxu0 0
          %715 = vmatpush1.bf16.msra.mxu0 0
          %716 = vmatprep.subr.bf16.mxu0 0
          %717 = vmatpush1.bf16.msra.mxu0 0
          %718 = vmatprep.subr.bf16.mxu0 0
          %719 = vmatpush1.bf16.msra.mxu0 0
          %720 = vmatprep.subr.bf16.mxu0 0
          %721 = vmatpush1.bf16.msra.mxu0 0
          %722 = vmatprep.subr.bf16.mxu0 0
          %723 = vmatpush1.bf16.msra.mxu0 0
          %724 = vmatprep.subr.bf16.mxu0 0
          %725 = vmatpush1.bf16.msra.mxu0 0
          %726 = vmatprep.subr.bf16.mxu0 0
          %727 = vmatpush1.bf16.msra.mxu0 0
          %728 = vmatprep.mubr.bf16.mxu0 0
          %729 = vmatmul.mubr.bf16.gmra.mrb[0].mxu0 %v630
          %v730 = vpop.f32.mrb[0].mxu0
          %v731 = vadd.f32 %v691, %v730
          %v732 = vpop.f32.mrb[0].mxu0
          %v733 = vpop.f32.mrb[0].mxu0
          %v734 = vpop.f32.mrb[0].mxu0
          %735 = vdwg.mxu0
          %v736 = vld [vmem:[%s605] sm:$0x1]
          %v738 = vlaneseq
          %v739 = vshrl.u32 %v738, 7
          %v740 = vsub.s32 0, %v739
          %v741 = vrot.slane %v736, %v740
          %v743 = vmul.f32 %v731, %v741
          %v744 = vld [vmem:[%s612] sm:$0x1]
          %v746 = vlaneseq
          %v747 = vshrl.u32 %v746, 7
          %v748 = vsub.s32 0, %v747
          %v749 = vrot.slane %v744, %v748
          %v751 = vadd.f32 %v743, %v749
          %vm752 = vcmp.ge.f32.partialorder %v751, 0.0
          %v753 = vmul.f32 %v751, 0.22916667
          %v754 = vsel %vm752, %v751, %v753
          %s755 = smul.u32 %s30, 8
          %s756 = scalar_lea.vmem [#allocation3], %s755
          %757 = vst [vmem:[%s756] sm:$0xff] %v754
        $region96: #{tpu_custom_call.1} parent=63 // pred_fallthru
          _
        %p758 = scmp.ge.s32.totalorder %s30, 2
        // Predicated region
        $region97: #{tpu_custom_call.1} parent=63 // pred_check
          %p759 = pneg %p758
        $region98: #{tpu_custom_call.1} parent=63 // pred_check_branch
          %761 = sbr.rel (%p759) target = $region100
        $region99: #{tpu_custom_call.1} parent=63 // pred_region
          %s762 = ssub.s32 %s30, 2
          %v763 = vld [vmem:[#allocation2] sm:$0xff]
          %v764 = vld [vmem:[#allocation2 + $0x8] sm:$0xff]
          %s765 = smul.u32 %s762, 8
          %s766 = scalar_lea.vmem [#allocation3], %s765
          %v767 = vld [vmem:[%s766] sm:$0xff]
          %v768 = vpack.c.bf16 %v767, %v767
          %v769 = vld [vmem:[%s539] sm:$0xff]
          %v770 = vld [vmem:[%s539 + $0x8] sm:$0xff]
          %v771 = vld [vmem:[%s539 + $0x10] sm:$0xff]
          %v772 = vld [vmem:[%s539 + $0x18] sm:$0xff]
          %v773 = vld [vmem:[%s539 + $0x20] sm:$0xff]
          %v774 = vld [vmem:[%s539 + $0x28] sm:$0xff]
          %v775 = vld [vmem:[%s539 + $0x30] sm:$0xff]
          %v776 = vld [vmem:[%s539 + $0x38] sm:$0xff]
          %v777 = vunpack.c.l.s8.bf16 %v769
          %v778 = vunpack.c.l.s8.bf16 %v770
          %v779 = vunpack.c.h.s8.bf16 %v769
          %v780 = vunpack.c.h.s8.bf16 %v770
          %v781 = vunpack.c.l.s8.bf16 %v771
          %v782 = vunpack.c.l.s8.bf16 %v772
          %v783 = vunpack.c.h.s8.bf16 %v771
          %v784 = vunpack.c.h.s8.bf16 %v772
          %v785 = vunpack.c.l.s8.bf16 %v773
          %v786 = vunpack.c.l.s8.bf16 %v774
          %v787 = vunpack.c.h.s8.bf16 %v773
          %v788 = vunpack.c.h.s8.bf16 %v774
          %v789 = vunpack.c.l.s8.bf16 %v775
          %v790 = vunpack.c.l.s8.bf16 %v776
          %v791 = vunpack.c.h.s8.bf16 %v775
          %v792 = vunpack.c.h.s8.bf16 %v776
          %793 = vmatprep.subr.bf16.mxu0 %v778
          %794 = vmatpush1.bf16.msra.mxu0 %v777
          %795 = vmatprep.subr.bf16.mxu0 %v780
          %796 = vmatpush1.bf16.msra.mxu0 %v779
          %797 = vmatprep.subr.bf16.mxu0 %v782
          %798 = vmatpush1.bf16.msra.mxu0 %v781
          %799 = vmatprep.subr.bf16.mxu0 %v784
          %800 = vmatpush1.bf16.msra.mxu0 %v783
          %801 = vmatprep.subr.bf16.mxu0 %v786
          %802 = vmatpush1.bf16.msra.mxu0 %v785
          %803 = vmatprep.subr.bf16.mxu0 %v788
          %804 = vmatpush1.bf16.msra.mxu0 %v787
          %805 = vmatprep.subr.bf16.mxu0 %v790
          %806 = vmatpush1.bf16.msra.mxu0 %v789
          %807 = vmatprep.subr.bf16.mxu0 %v792
          %808 = vmatpush1.bf16.msra.mxu0 %v791
          %809 = vmatprep.subr.bf16.mxu0 0
          %810 = vmatpush1.bf16.msra.mxu0 0
          %811 = vmatprep.subr.bf16.mxu0 0
          %812 = vmatpush1.bf16.msra.mxu0 0
          %813 = vmatprep.subr.bf16.mxu0 0
          %814 = vmatpush1.bf16.msra.mxu0 0
          %815 = vmatprep.subr.bf16.mxu0 0
          %816 = vmatpush1.bf16.msra.mxu0 0
          %817 = vmatprep.subr.bf16.mxu0 0
          %818 = vmatpush1.bf16.msra.mxu0 0
          %819 = vmatprep.subr.bf16.mxu0 0
          %820 = vmatpush1.bf16.msra.mxu0 0
          %821 = vmatprep.subr.bf16.mxu0 0
          %822 = vmatpush1.bf16.msra.mxu0 0
          %823 = vmatprep.subr.bf16.mxu0 0
          %824 = vmatpush1.bf16.msra.mxu0 0
          %825 = vmatprep.mubr.bf16.mxu0 0
          %826 = vmatmul.mubr.bf16.gmra.mrb[0].mxu0 %v768
          %v827 = vpop.f32.mrb[0].mxu0
          %v828 = vadd.f32 0.0, %v827
          %v829 = vpop.f32.mrb[0].mxu0
          %v830 = vadd.f32 0.0, %v829
          %v831 = vpop.f32.mrb[0].mxu0
          %v832 = vpop.f32.mrb[0].mxu0
          %833 = vdwg.mxu0
          %v834 = vadd.f32 %v763, %v828
          %v835 = vadd.f32 %v764, %v830
          %836 = vst [vmem:[#allocation2] sm:$0xff] %v834
          %837 = vst [vmem:[#allocation2 + $0x8] sm:$0xff] %v835
        $region100: #{tpu_custom_call.1} parent=63 // pred_fallthru
          _
        %p838 = scmp.eq.s32.totalorder %s30, 3
        // Predicated region
        $region101: #{tpu_custom_call.1} parent=63 // pred_check
          %p839 = pneg %p838
        $region102: #{tpu_custom_call.1} parent=63 // pred_check_branch
          %841 = sbr.rel (%p839) target = $region104
        $region103: #{tpu_custom_call.1} parent=63 // pred_region
          %v842 = vld [vmem:[#allocation2] sm:$0xff]
          %v843 = vld [vmem:[#allocation2 + $0x8] sm:$0xff]
          %v844 = vld [vmem:[%s7] sm:$0x3]
          %v846 = vlaneseq
          %v847 = vshrl.u32 %v846, 7
          %v848 = vsub.s32 0, %v847
          %v849 = vrot.slane %v844, %v848
          %v850 = vlaneseq
          %v851 = vshrl.u32 %v850, 7
          %v852 = vsub.s32 1, %v851
          %v853 = vrot.slane %v844, %v852
          %v856 = vmul.f32 %v842, %v849
          %v857 = vmul.f32 %v843, %v853
          %v858 = vld [vmem:[%s8] sm:$0x3]
          %v860 = vlaneseq
          %v861 = vshrl.u32 %v860, 7
          %v862 = vsub.s32 0, %v861
          %v863 = vrot.slane %v858, %v862
          %v864 = vlaneseq
          %v865 = vshrl.u32 %v864, 7
          %v866 = vsub.s32 1, %v865
          %v867 = vrot.slane %v858, %v866
          %v870 = vadd.f32 %v856, %v863
          %v871 = vadd.f32 %v857, %v867
          %v872 = vxor.u32 %v870, 2147483648
          %v873 = vxor.u32 %v871, 2147483648
          %v874 = vmul.f32 %v872, 1.442695
          %v875 = vpow.pop %v874
          %v876 = vmul.f32 %v873, 1.442695
          %v877 = vpow.pop %v876
          %v878 = vadd.f32 %v875, 1.0
          %v879 = vadd.f32 %v877, 1.0
          %v880 = vrcp.pop %v878
          %v881 = vmul.f32 1.0, %v880
          %v882 = vrcp.pop %v879
          %v883 = vmul.f32 1.0, %v882
          %v884 = vadd.f32 %v881, 1.0
          %v885 = vadd.f32 %v883, 1.0
          %v886 = vld [vmem:[#allocation3] sm:$0xff]
          %v887 = vmul.f32 %v886, %v884
          %v888 = vpack.c.bf16 %v887, %v887
          %v889 = vld [vmem:[#allocation12] sm:$0xf]
          %v890 = vld [vmem:[#allocation12 + $0x4] sm:$0xf]
          %v891 = vld [vmem:[#allocation12 + $0x8] sm:$0xf]
          %v892 = vld [vmem:[#allocation12 + $0xc] sm:$0xf]
          %v893 = vld [vmem:[#allocation12 + $0x10] sm:$0xf]
          %v894 = vld [vmem:[#allocation12 + $0x14] sm:$0xf]
          %v895 = vld [vmem:[#allocation12 + $0x18] sm:$0xf]
          %v896 = vld [vmem:[#allocation12 + $0x1c] sm:$0xf]
          %v897 = vld [vmem:[#allocation12 + $0x20] sm:$0xf]
          %v898 = vld [vmem:[#allocation12 + $0x24] sm:$0xf]
          %v899 = vld [vmem:[#allocation12 + $0x28] sm:$0xf]
          %v900 = vld [vmem:[#allocation12 + $0x2c] sm:$0xf]
          %v901 = vld [vmem:[#allocation12 + $0x30] sm:$0xf]
          %v902 = vld [vmem:[#allocation12 + $0x34] sm:$0xf]
          %v903 = vld [vmem:[#allocation12 + $0x38] sm:$0xf]
          %v904 = vld [vmem:[#allocation12 + $0x3c] sm:$0xf]
          %s905 = scalar_lea.vmem [#allocation3], 8
          %v906 = vld [vmem:[%s905] sm:$0xff]
          %v907 = vmul.f32 %v906, %v885
          %v908 = vpack.c.bf16 %v907, %v907
          %v909 = vld [vmem:[#allocation12 + $0x40] sm:$0xf]
          %v910 = vld [vmem:[#allocation12 + $0x44] sm:$0xf]
          %v911 = vld [vmem:[#allocation12 + $0x48] sm:$0xf]
          %v912 = vld [vmem:[#allocation12 + $0x4c] sm:$0xf]
          %v913 = vld [vmem:[#allocation12 + $0x50] sm:$0xf]
          %v914 = vld [vmem:[#allocation12 + $0x54] sm:$0xf]
          %v915 = vld [vmem:[#allocation12 + $0x58] sm:$0xf]
          %v916 = vld [vmem:[#allocation12 + $0x5c] sm:$0xf]
          %v917 = vld [vmem:[#allocation12 + $0x60] sm:$0xf]
          %v918 = vld [vmem:[#allocation12 + $0x64] sm:$0xf]
          %v919 = vld [vmem:[#allocation12 + $0x68] sm:$0xf]
          %v920 = vld [vmem:[#allocation12 + $0x6c] sm:$0xf]
          %v921 = vld [vmem:[#allocation12 + $0x70] sm:$0xf]
          %v922 = vld [vmem:[#allocation12 + $0x74] sm:$0xf]
          %v923 = vld [vmem:[#allocation12 + $0x78] sm:$0xf]
          %v924 = vld [vmem:[#allocation12 + $0x7c] sm:$0xf]
          %v941 = vunpack.c.l.b16 %v909
          %v942 = vunpack.c.l.b16 %v910
          %v943 = vunpack.c.l.b16 %v911
          %v944 = vunpack.c.l.b16 %v912
          %v945 = vunpack.c.l.b16 %v913
          %v946 = vunpack.c.l.b16 %v914
          %v947 = vunpack.c.l.b16 %v915
          %v948 = vunpack.c.l.b16 %v916
          %v949 = vunpack.c.l.b16 %v917
          %v950 = vunpack.c.l.b16 %v918
          %v951 = vunpack.c.l.b16 %v919
          %v952 = vunpack.c.l.b16 %v920
          %v953 = vunpack.c.l.b16 %v921
          %v954 = vunpack.c.l.b16 %v922
          %v955 = vunpack.c.l.b16 %v923
          %v956 = vunpack.c.l.b16 %v924
          %v957 = vpack.c.b16 %v942, %v941
          %v958 = vpack.c.b16 %v944, %v943
          %v959 = vpack.c.b16 %v946, %v945
          %v960 = vpack.c.b16 %v948, %v947
          %v961 = vpack.c.b16 %v950, %v949
          %v962 = vpack.c.b16 %v952, %v951
          %v963 = vpack.c.b16 %v954, %v953
          %v964 = vpack.c.b16 %v956, %v955
          %973 = vmatprep.subr.bf16.mxu0 0
          %974 = vmatpush1.bf16.msra.mxu0 %v957
          %975 = vmatprep.subr.bf16.mxu0 0
          %976 = vmatpush1.bf16.msra.mxu0 %v958
          %977 = vmatprep.subr.bf16.mxu0 0
          %978 = vmatpush1.bf16.msra.mxu0 %v959
          %979 = vmatprep.subr.bf16.mxu0 0
          %980 = vmatpush1.bf16.msra.mxu0 %v960
          %981 = vmatprep.subr.bf16.mxu0 0
          %982 = vmatpush1.bf16.msra.mxu0 %v961
          %983 = vmatprep.subr.bf16.mxu0 0
          %984 = vmatpush1.bf16.msra.mxu0 %v962
          %985 = vmatprep.subr.bf16.mxu0 0
          %986 = vmatpush1.bf16.msra.mxu0 %v963
          %987 = vmatprep.subr.bf16.mxu0 0
          %988 = vmatpush1.bf16.msra.mxu0 %v964
          %989 = vmatprep.subr.bf16.mxu0 0
          %990 = vmatpush1.bf16.msra.mxu0 0
          %991 = vmatprep.subr.bf16.mxu0 0
          %992 = vmatpush1.bf16.msra.mxu0 0
          %993 = vmatprep.subr.bf16.mxu0 0
          %994 = vmatpush1.bf16.msra.mxu0 0
          %995 = vmatprep.subr.bf16.mxu0 0
          %996 = vmatpush1.bf16.msra.mxu0 0
          %997 = vmatprep.subr.bf16.mxu0 0
          %998 = vmatpush1.bf16.msra.mxu0 0
          %999 = vmatprep.subr.bf16.mxu0 0
          %1000 = vmatpush1.bf16.msra.mxu0 0
          %1001 = vmatprep.subr.bf16.mxu0 0
          %1002 = vmatpush1.bf16.msra.mxu0 0
          %1003 = vmatprep.subr.bf16.mxu0 0
          %1004 = vmatpush1.bf16.msra.mxu0 0
          %1005 = vmatprep.mubr.bf16.mxu0 0
          %1006 = vmatmul.mubr.bf16.gmra.mrb[0].mxu0 %v908
          %v1007 = vpop.f32.mrb[0].mxu0
          %v1008 = vadd.f32 0.0, %v1007
          %v1009 = vpop.f32.mrb[0].mxu0
          %v1010 = vpop.f32.mrb[0].mxu0
          %v1011 = vpop.f32.mrb[0].mxu0
          %1012 = vdwg.mxu0
          %v1029 = vunpack.c.l.b16 %v889
          %v1030 = vunpack.c.l.b16 %v890
          %v1031 = vunpack.c.l.b16 %v891
          %v1032 = vunpack.c.l.b16 %v892
          %v1033 = vunpack.c.l.b16 %v893
          %v1034 = vunpack.c.l.b16 %v894
          %v1035 = vunpack.c.l.b16 %v895
          %v1036 = vunpack.c.l.b16 %v896
          %v1037 = vunpack.c.l.b16 %v897
          %v1038 = vunpack.c.l.b16 %v898
          %v1039 = vunpack.c.l.b16 %v899
          %v1040 = vunpack.c.l.b16 %v900
          %v1041 = vunpack.c.l.b16 %v901
          %v1042 = vunpack.c.l.b16 %v902
          %v1043 = vunpack.c.l.b16 %v903
          %v1044 = vunpack.c.l.b16 %v904
          %v1045 = vpack.c.b16 %v1030, %v1029
          %v1046 = vpack.c.b16 %v1032, %v1031
          %v1047 = vpack.c.b16 %v1034, %v1033
          %v1048 = vpack.c.b16 %v1036, %v1035
          %v1049 = vpack.c.b16 %v1038, %v1037
          %v1050 = vpack.c.b16 %v1040, %v1039
          %v1051 = vpack.c.b16 %v1042, %v1041
          %v1052 = vpack.c.b16 %v1044, %v1043
          %1061 = vmatprep.subr.bf16.mxu0 0
          %1062 = vmatpush1.bf16.msra.mxu0 %v1045
          %1063 = vmatprep.subr.bf16.mxu0 0
          %1064 = vmatpush1.bf16.msra.mxu0 %v1046
          %1065 = vmatprep.subr.bf16.mxu0 0
          %1066 = vmatpush1.bf16.msra.mxu0 %v1047
          %1067 = vmatprep.subr.bf16.mxu0 0
          %1068 = vmatpush1.bf16.msra.mxu0 %v1048
          %1069 = vmatprep.subr.bf16.mxu0 0
          %1070 = vmatpush1.bf16.msra.mxu0 %v1049
          %1071 = vmatprep.subr.bf16.mxu0 0
          %1072 = vmatpush1.bf16.msra.mxu0 %v1050
          %1073 = vmatprep.subr.bf16.mxu0 0
          %1074 = vmatpush1.bf16.msra.mxu0 %v1051
          %1075 = vmatprep.subr.bf16.mxu0 0
          %1076 = vmatpush1.bf16.msra.mxu0 %v1052
          %1077 = vmatprep.subr.bf16.mxu0 0
          %1078 = vmatpush1.bf16.msra.mxu0 0
          %1079 = vmatprep.subr.bf16.mxu0 0
          %1080 = vmatpush1.bf16.msra.mxu0 0
          %1081 = vmatprep.subr.bf16.mxu0 0
          %1082 = vmatpush1.bf16.msra.mxu0 0
          %1083 = vmatprep.subr.bf16.mxu0 0
          %1084 = vmatpush1.bf16.msra.mxu0 0
          %1085 = vmatprep.subr.bf16.mxu0 0
          %1086 = vmatpush1.bf16.msra.mxu0 0
          %1087 = vmatprep.subr.bf16.mxu0 0
          %1088 = vmatpush1.bf16.msra.mxu0 0
          %1089 = vmatprep.subr.bf16.mxu0 0
          %1090 = vmatpush1.bf16.msra.mxu0 0
          %1091 = vmatprep.subr.bf16.mxu0 0
          %1092 = vmatpush1.bf16.msra.mxu0 0
          %1093 = vmatprep.mubr.bf16.mxu0 0
          %1094 = vmatmul.mubr.bf16.gmra.mrb[0].mxu0 %v888
          %v1095 = vpop.f32.mrb[0].mxu0
          %v1096 = vadd.f32 %v1008, %v1095
          %v1097 = vpop.f32.mrb[0].mxu0
          %v1098 = vpop.f32.mrb[0].mxu0
          %v1099 = vpop.f32.mrb[0].mxu0
          %1100 = vdwg.mxu0
          %v1101 = vld [vmem:[%s10] sm:$0x1]
          %v1103 = vlaneseq
          %v1104 = vshrl.u32 %v1103, 7
          %v1105 = vsub.s32 0, %v1104
          %v1106 = vrot.slane %v1101, %v1105
          %v1108 = vadd.f32 %v1096, %v1106
          %1109 = vst [vmem:[#allocation13] sm:$0xff] %v1108
        $region104: #{tpu_custom_call.1} parent=63 // pred_fallthru
          _
        // Predicated region
        $region105: #{tpu_custom_call.1} parent=63 // pred_check
          %p1110 = pneg %p343
        $region106: #{tpu_custom_call.1} parent=63 // pred_check_branch
          %1112 = sbr.rel (%p1110) target = $region108
        $region107: #{tpu_custom_call.1} parent=63 // pred_region
          %s1114 = ssub.s32 128, 128
          %1115 = vsyncadd [#allocation6], %s1114
          %s1116 = smul.addr %s29, 128
          %s1117 = scalar_lea.hbm %s11, %s1116
          %s1119 = sshll.u32 [#allocation13], 4
          %s1120 = int_to_ptr.vmem [resolvable:$true] %s1119
          %1122 = dma.vmem_to_hbm [thread:$0]  %s1120, 128, %s1117, [#allocation6]
        $region108: #{tpu_custom_call.1} parent=63 // pred_fallthru
          _
        // Predicated region
        $region109: #{tpu_custom_call.1} parent=63 // pred_check
          %p1123 = pneg %p343
        $region110: #{tpu_custom_call.1} parent=63 // pred_check_branch
          %1125 = sbr.rel (%p1123) target = $region112
        $region111: #{tpu_custom_call.1} parent=63 // pred_region
          %1126 = dma.done [#allocation6], 128
        $region112: #{tpu_custom_call.1} parent=63 // pred_fallthru
          _
      $region64: #{tpu_custom_call.1} parent=5 // pred_fallthru
        _
      %p1127 = scmp.le.s32.totalorder 2, %s20
      // Predicated region
      $region113: #{tpu_custom_call.1} parent=5 // pred_check
        %p1128 = pneg %p1127
      $region114: #{tpu_custom_call.1} parent=5 // pred_check_branch
        %1130 = sbr.rel (%p1128) target = $region116
      $region115: #{tpu_custom_call.1} parent=5 // pred_region
        %s1131 = ssub.s32 %s20, 2
      $region116: #{tpu_custom_call.1} parent=5 // pred_fallthru
        _
    $region6: #{tpu_custom_call.1} parent=1 // loop_footer
      %s24 = sadd.s32 1, %s20
    $region7: #{tpu_custom_call.1} parent=1 // loop_footer_branch
      %19 = sbr.rel target = $region3
    $region8: #{tpu_custom_call.1} parent=1 // loop_exit
      _
    %1132 = vsyncpa [#allocation5], 1
    %s1133 = scalar_lea.sflag [#allocation5], 1
    %1134 = vsyncpa %s1133, 1
    %1135 = vsyncpa [#allocation8], 1
    %1136 = vsyncpa [#allocation6], 1
    %s1137 = scalar_lea.sflag [#allocation6], 1
    %1138 = vsyncpa %s1137, 1

</llo_original>
